<compile_context>
chip_gen: v7x
topology: tpu7x:2x2x1
jax: 0.10.0
libtpu: 0.0.40
codegen_flags: <defaults>
</compile_context>

<pallas_src>
import math

import jax
import jax.numpy as jnp
import numpy as np
from jax import lax
from jax.experimental import pallas as pl
from jax.experimental.pallas import tpu as pltpu

EPS = 1e-5


def conv_bn_relu_kernel(p_ref, w_ref, g_ref, b_ref, o_ref, conv_ref):
    """Fused conv(matmul) + BatchNorm(batch stats) + ReLU for one Cout block.

    p_ref:    (M, Kpad)    im2col patches, bf16 (K = 9*Cin zero-padded), grid-invariant
    w_ref:    (Kpad, Cblk) conv weights (same K padding), bf16
    g_ref:    (1, Cblk)    BN gamma, f32
    b_ref:    (1, Cblk)    BN beta, f32
    o_ref:    (M, Cblk)    output, f32
    conv_ref: (M, Cblk)    f32 VMEM scratch staging the conv result
    """
    m, cblk = o_ref.shape

    # ---- conv: one lane-dense MXU matmul, staged into VMEM scratch ----
    conv_ref[...] = jnp.dot(p_ref[...], w_ref[...],
                            preferred_element_type=jnp.float32)

    # ---- BN stats: one traversal accumulating sum and sum-of-squares ----
    chunk = math.gcd(m, 64)           # 64-row (8-vreg) chunks; m=512 -> 8 iters
    nchunks = m // chunk

    def stats_body(i, carry):
        s, ss = carry
        row = pl.multiple_of(i * chunk, chunk)
        c = conv_ref[pl.ds(row, chunk), :]
        return (s + jnp.sum(c, axis=0, keepdims=True),
                ss + jnp.sum(c * c, axis=0, keepdims=True))

    zeros = jnp.zeros((1, cblk), jnp.float32)
    s, ss = lax.fori_loop(0, nchunks, stats_body, (zeros, zeros), unroll=True)

    inv_m = 1.0 / float(m)
    mean = s * inv_m
    var = jnp.maximum(ss * inv_m - mean * mean, 0.0)   # clamp: cancellation guard
    scale = lax.rsqrt(var + EPS) * g_ref[...]
    shift = b_ref[...] - mean * scale

    # ---- normalize + affine + ReLU, streamed from scratch in chunks ----
    def norm_body(i, carry):
        row = pl.multiple_of(i * chunk, chunk)
        idx = pl.ds(row, chunk)
        o_ref[idx, :] = jnp.maximum(conv_ref[idx, :] * scale + shift, 0.0)
        return carry

    lax.fori_loop(0, nchunks, norm_body, 0, unroll=True)


def _pick_cout_block(cout: int) -> int:
    """Per-generation Cout blocking.

    Megacore chips (v4/v5p/v7x: 2 TensorCores per device): two 128-wide blocks
    sharded via dimension_semantics=("parallel",).  Single-TC chips (v5e/v6e):
    a single full-width lane-dense block -- extra grid steps there buy no
    parallelism and just add ~0.35 us/step plus duplicated input processing.
    """
    try:
        kind = jax.devices()[0].device_kind.lower()
    except Exception:
        kind = ""
    megacore = any(tag in kind for tag in ("v4", "v5p", "v7", "7x"))
    if megacore and cout % 256 == 0:
        return 128
    return cout


@jax.jit
def conv_block_forward(x_nchw, w_oihw, bias, gamma, beta):
    # `bias` is accepted for API parity with nn.Conv2d but intentionally unused:
    # under training-mode BatchNorm the conv bias cancels exactly
    # (mean(conv + b) = mean(conv) + b, variance unchanged).
    del bias
    n, cin, h, w = x_nchw.shape
    cout, _, kh, kw = w_oihw.shape
    m = n * h * w
    k = kh * kw * cin
    kpad = max(128, ((k + 127) // 128) * 128)   # lane-align the contraction dim

    # ---- wrapper-side im2col (tiny: M*Kpad*2 B ~= 128 KiB in HBM), bf16 ----
    x_nhwc = jnp.transpose(x_nchw, (0, 2, 3, 1)).astype(jnp.float32)
    x_pad = jnp.pad(x_nhwc, ((0, 0), (1, 1), (1, 1), (0, 0)))
    taps = [x_pad[:, di:di + h, dj:dj + w, :]
            for di in range(kh) for dj in range(kw)]
    patches = jnp.concatenate(taps, axis=-1).reshape(m, k)
    patches = jnp.pad(patches, ((0, 0), (0, kpad - k))).astype(jnp.bfloat16)

    # weights -> (Kpad, Cout), matching patch column order (tap-major, Cin-minor)
    w2 = jnp.transpose(w_oihw, (2, 3, 1, 0)).reshape(k, cout)
    w2 = jnp.pad(w2, ((0, kpad - k), (0, 0))).astype(jnp.bfloat16)
    g2 = gamma.reshape(1, cout).astype(jnp.float32)
    be2 = beta.reshape(1, cout).astype(jnp.float32)

    cblk = _pick_cout_block(cout)
    grid = (cout // cblk,)
    # NOTE(scaling): whole-M-resident design.  Per-core VMEM ~= patches
    # (M*Kpad*2 B, double-buffered) + conv scratch (M*Cblk*4 B) + output
    # (2*M*Cblk*4 B).  On v7x (64 MiB physical / 32 MiB default scoped VMEM)
    # the M at which an "arbitrary" M grid axis (sum/sumsq scratch + second
    # normalize pass) becomes necessary is roughly half the v5e/v6e threshold;
    # re-derive the cutover per generation rather than reusing one number.

    cost = pl.CostEstimate(
        flops=2 * m * k * cout,
        transcendentals=0,
        bytes_accessed=(patches.size * 2 + w2.size * 2
                        + (g2.size + be2.size) * 4 + m * cout * 4),
    )

    out_flat = pl.pallas_call(
        conv_bn_relu_kernel,
        out_shape=jax.ShapeDtypeStruct((m, cout), jnp.float32),
        grid_spec=pltpu.PrefetchScalarGridSpec(
            num_scalar_prefetch=0,
            grid=grid,
            in_specs=[
                pl.BlockSpec((m, kpad), lambda j: (0, 0)),    # grid-invariant
                pl.BlockSpec((kpad, cblk), lambda j: (0, j)),
                pl.BlockSpec((1, cblk), lambda j: (0, j)),
                pl.BlockSpec((1, cblk), lambda j: (0, j)),
            ],
            out_specs=pl.BlockSpec((m, cblk), lambda j: (0, j)),
            scratch_shapes=[pltpu.VMEM((m, cblk), jnp.float32)],
        ),
        compiler_params=pltpu.CompilerParams(
            dimension_semantics=("parallel",),
            vmem_limit_bytes=32 * 1024 * 1024,
        ),
        cost_estimate=cost,
    )(patches, w2, g2, be2)

    # back to NCHW (PyTorch layout)
    return jnp.transpose(out_flat.reshape(n, h, w, cout), (0, 3, 1, 2))


def _reference(x_nchw, w_oihw, bias, gamma, beta):
    """Pure-JAX reference matching PyTorch semantics (BN in training mode)."""
    conv = lax.conv_general_dilated(
        x_nchw, w_oihw, window_strides=(1, 1), padding=((1, 1), (1, 1)),
        dimension_numbers=("NCHW", "OIHW", "NCHW"))
    conv = conv + bias.reshape(1, -1, 1, 1)
    mean = jnp.mean(conv, axis=(0, 2, 3), keepdims=True)
    var = jnp.mean((conv - mean) ** 2, axis=(0, 2, 3), keepdims=True)
    y = (conv - mean) * lax.rsqrt(var + EPS)
    y = y * gamma.reshape(1, -1, 1, 1) + beta.reshape(1, -1, 1, 1)
    return jnp.maximum(y, 0.0)


if __name__ == "__main__":
    # ConvBlock(input_channels=9, output_channels=256), small spatial input.
    N, CIN, H, W = 2, 9, 16, 16
    COUT, KH, KW = 256, 3, 3

    key = jax.random.PRNGKey(0)
    kx, kw_, kb, kg, kbeta = jax.random.split(key, 5)

    x = jax.random.normal(kx, (N, CIN, H, W), dtype=jnp.float32)
    # Deterministic synthetic parameters (shapes follow nn.Conv2d / nn.BatchNorm2d).
    w = jax.random.normal(kw_, (COUT, CIN, KH, KW), dtype=jnp.float32) * 0.1
    b = jax.random.normal(kb, (COUT,), dtype=jnp.float32) * 0.1
    gamma = 1.0 + 0.1 * jax.random.normal(kg, (COUT,), dtype=jnp.float32)
    beta = 0.1 * jax.random.normal(kbeta, (COUT,), dtype=jnp.float32)

    out = jax.block_until_ready(conv_block_forward(x, w, b, gamma, beta))
    ref = jax.block_until_ready(_reference(x, w, b, gamma, beta))

    assert out.shape == (N, COUT, H, W), out.shape
    np.testing.assert_allclose(np.asarray(out), np.asarray(ref),
                               atol=5e-2, rtol=5e-2)

    print("KERNEL_OK")
</pallas_src>

<mosaic_0001>
module attributes {stable_mosaic.version = 11 : i64} {
  func.func @conv_bn_relu_kernel(%arg0: i32, %arg1: memref<512x128xbf16, #tpu.memory_space<vmem>>, %arg2: memref<128x256xbf16, #tpu.memory_space<vmem>>, %arg3: memref<1x256xf32, #tpu.memory_space<vmem>>, %arg4: memref<1x256xf32, #tpu.memory_space<vmem>>, %arg5: memref<512x256xf32, #tpu.memory_space<vmem>>, %arg6: memref<512x256xf32, #tpu.memory_space<vmem>>) attributes {dimension_semantics = [#tpu.dimension_semantics<parallel>], iteration_bounds = array<i64: 1>, scalar_prefetch = 0 : i64, scratch_operands = 1 : i64, tpu.core_type = #tpu.core_type<tc>, window_params = [{pipeline_mode = #tpu.pipeline_mode<synchronous>, transform_indices = @transform_0, window_bounds = array<i64: 512, 128>}, {transform_indices = @transform_1, window_bounds = array<i64: 128, 256>}, {transform_indices = @transform_2, window_bounds = array<i64: 1, 256>}, {transform_indices = @transform_3, window_bounds = array<i64: 1, 256>}, {transform_indices = @transform_4, window_bounds = array<i64: 512, 256>}]} {
    %c0 = arith.constant 0 : index
    %c0_0 = arith.constant 0 : index
    %0 = vector.load %arg1[%c0, %c0_0] : memref<512x128xbf16, #tpu.memory_space<vmem>>, vector<512x128xbf16>
    %c0_1 = arith.constant 0 : index
    %c0_2 = arith.constant 0 : index
    %1 = vector.load %arg2[%c0_1, %c0_2] : memref<128x256xbf16, #tpu.memory_space<vmem>>, vector<128x256xbf16>
    %cst = arith.constant dense<0.000000e+00> : vector<512x256xf32>
    %2 = tpu.matmul %0, %1, %cst {dimension_numbers = #tpu.dot_dimension_numbers<[1], [0], [0], [1], [0, 0, 1, 1], [], []>} : vector<512x128xbf16>, vector<128x256xbf16>, vector<512x256xf32> -> vector<512x256xf32>
    %c0_3 = arith.constant 0 : index
    %c0_4 = arith.constant 0 : index
    %3 = vector.load %arg6[%c0_3, %c0_4] : memref<512x256xf32, #tpu.memory_space<vmem>>, vector<512x256xf32>
    tpu.vector_store %arg6[%c0_3, %c0_4], %2 {strides = array<i32>} : memref<512x256xf32, #tpu.memory_space<vmem>>, vector<512x256xf32>,
    %cst_5 = arith.constant 0.000000e+00 : f32
    %4 = vector.broadcast %cst_5 : f32 to vector<1x256xf32>
    %c0_i32 = arith.constant 0 : i32
    %c64_i32 = arith.constant 64 : i32
    %5 = arith.muli %c0_i32, %c64_i32 : i32
    %6 = tpu.assume_multiple %5, 64 : i32
    %7 = arith.index_cast %6 : i32 to index
    %c0_6 = arith.constant 0 : index
    %8 = vector.load %arg6[%7, %c0_6] : memref<512x256xf32, #tpu.memory_space<vmem>>, vector<64x256xf32>
    %cst_7 = arith.constant dense<0.000000e+00> : vector<256xf32>
    %9 = vector.multi_reduction <add>, %8, %cst_7 [0] : vector<64x256xf32> to vector<256xf32>
    %10 = vector.shape_cast %9 : vector<256xf32> to vector<1x256xf32>
    %11 = arith.addf %4, %10 : vector<1x256xf32>
    %12 = arith.mulf %8, %8 : vector<64x256xf32>
    %cst_8 = arith.constant dense<0.000000e+00> : vector<256xf32>
    %13 = vector.multi_reduction <add>, %12, %cst_8 [0] : vector<64x256xf32> to vector<256xf32>
    %14 = vector.shape_cast %13 : vector<256xf32> to vector<1x256xf32>
    %15 = arith.addf %4, %14 : vector<1x256xf32>
    %c1_i32 = arith.constant 1 : i32
    %c64_i32_9 = arith.constant 64 : i32
    %16 = arith.muli %c1_i32, %c64_i32_9 : i32
    %17 = tpu.assume_multiple %16, 64 : i32
    %18 = arith.index_cast %17 : i32 to index
    %c0_10 = arith.constant 0 : index
    %19 = vector.load %arg6[%18, %c0_10] : memref<512x256xf32, #tpu.memory_space<vmem>>, vector<64x256xf32>
    %cst_11 = arith.constant dense<0.000000e+00> : vector<256xf32>
    %20 = vector.multi_reduction <add>, %19, %cst_11 [0] : vector<64x256xf32> to vector<256xf32>
    %21 = vector.shape_cast %20 : vector<256xf32> to vector<1x256xf32>
    %22 = arith.addf %11, %21 : vector<1x256xf32>
    %23 = arith.mulf %19, %19 : vector<64x256xf32>
    %cst_12 = arith.constant dense<0.000000e+00> : vector<256xf32>
    %24 = vector.multi_reduction <add>, %23, %cst_12 [0] : vector<64x256xf32> to vector<256xf32>
    %25 = vector.shape_cast %24 : vector<256xf32> to vector<1x256xf32>
    %26 = arith.addf %15, %25 : vector<1x256xf32>
    %c2_i32 = arith.constant 2 : i32
    %c64_i32_13 = arith.constant 64 : i32
    %27 = arith.muli %c2_i32, %c64_i32_13 : i32
    %28 = tpu.assume_multiple %27, 64 : i32
    %29 = arith.index_cast %28 : i32 to index
    %c0_14 = arith.constant 0 : index
    %30 = vector.load %arg6[%29, %c0_14] : memref<512x256xf32, #tpu.memory_space<vmem>>, vector<64x256xf32>
    %cst_15 = arith.constant dense<0.000000e+00> : vector<256xf32>
    %31 = vector.multi_reduction <add>, %30, %cst_15 [0] : vector<64x256xf32> to vector<256xf32>
    %32 = vector.shape_cast %31 : vector<256xf32> to vector<1x256xf32>
    %33 = arith.addf %22, %32 : vector<1x256xf32>
    %34 = arith.mulf %30, %30 : vector<64x256xf32>
    %cst_16 = arith.constant dense<0.000000e+00> : vector<256xf32>
    %35 = vector.multi_reduction <add>, %34, %cst_16 [0] : vector<64x256xf32> to vector<256xf32>
    %36 = vector.shape_cast %35 : vector<256xf32> to vector<1x256xf32>
    %37 = arith.addf %26, %36 : vector<1x256xf32>
    %c3_i32 = arith.constant 3 : i32
    %c64_i32_17 = arith.constant 64 : i32
    %38 = arith.muli %c3_i32, %c64_i32_17 : i32
    %39 = tpu.assume_multiple %38, 64 : i32
    %40 = arith.index_cast %39 : i32 to index
    %c0_18 = arith.constant 0 : index
    %41 = vector.load %arg6[%40, %c0_18] : memref<512x256xf32, #tpu.memory_space<vmem>>, vector<64x256xf32>
    %cst_19 = arith.constant dense<0.000000e+00> : vector<256xf32>
    %42 = vector.multi_reduction <add>, %41, %cst_19 [0] : vector<64x256xf32> to vector<256xf32>
    %43 = vector.shape_cast %42 : vector<256xf32> to vector<1x256xf32>
    %44 = arith.addf %33, %43 : vector<1x256xf32>
    %45 = arith.mulf %41, %41 : vector<64x256xf32>
    %cst_20 = arith.constant dense<0.000000e+00> : vector<256xf32>
    %46 = vector.multi_reduction <add>, %45, %cst_20 [0] : vector<64x256xf32> to vector<256xf32>
    %47 = vector.shape_cast %46 : vector<256xf32> to vector<1x256xf32>
    %48 = arith.addf %37, %47 : vector<1x256xf32>
    %c4_i32 = arith.constant 4 : i32
    %c64_i32_21 = arith.constant 64 : i32
    %49 = arith.muli %c4_i32, %c64_i32_21 : i32
    %50 = tpu.assume_multiple %49, 64 : i32
    %51 = arith.index_cast %50 : i32 to index
    %c0_22 = arith.constant 0 : index
    %52 = vector.load %arg6[%51, %c0_22] : memref<512x256xf32, #tpu.memory_space<vmem>>, vector<64x256xf32>
    %cst_23 = arith.constant dense<0.000000e+00> : vector<256xf32>
    %53 = vector.multi_reduction <add>, %52, %cst_23 [0] : vector<64x256xf32> to vector<256xf32>
    %54 = vector.shape_cast %53 : vector<256xf32> to vector<1x256xf32>
    %55 = arith.addf %44, %54 : vector<1x256xf32>
    %56 = arith.mulf %52, %52 : vector<64x256xf32>
    %cst_24 = arith.constant dense<0.000000e+00> : vector<256xf32>
    %57 = vector.multi_reduction <add>, %56, %cst_24 [0] : vector<64x256xf32> to vector<256xf32>
    %58 = vector.shape_cast %57 : vector<256xf32> to vector<1x256xf32>
    %59 = arith.addf %48, %58 : vector<1x256xf32>
    %c5_i32 = arith.constant 5 : i32
    %c64_i32_25 = arith.constant 64 : i32
    %60 = arith.muli %c5_i32, %c64_i32_25 : i32
    %61 = tpu.assume_multiple %60, 64 : i32
    %62 = arith.index_cast %61 : i32 to index
    %c0_26 = arith.constant 0 : index
    %63 = vector.load %arg6[%62, %c0_26] : memref<512x256xf32, #tpu.memory_space<vmem>>, vector<64x256xf32>
    %cst_27 = arith.constant dense<0.000000e+00> : vector<256xf32>
    %64 = vector.multi_reduction <add>, %63, %cst_27 [0] : vector<64x256xf32> to vector<256xf32>
    %65 = vector.shape_cast %64 : vector<256xf32> to vector<1x256xf32>
    %66 = arith.addf %55, %65 : vector<1x256xf32>
    %67 = arith.mulf %63, %63 : vector<64x256xf32>
    %cst_28 = arith.constant dense<0.000000e+00> : vector<256xf32>
    %68 = vector.multi_reduction <add>, %67, %cst_28 [0] : vector<64x256xf32> to vector<256xf32>
    %69 = vector.shape_cast %68 : vector<256xf32> to vector<1x256xf32>
    %70 = arith.addf %59, %69 : vector<1x256xf32>
    %c6_i32 = arith.constant 6 : i32
    %c64_i32_29 = arith.constant 64 : i32
    %71 = arith.muli %c6_i32, %c64_i32_29 : i32
    %72 = tpu.assume_multiple %71, 64 : i32
    %73 = arith.index_cast %72 : i32 to index
    %c0_30 = arith.constant 0 : index
    %74 = vector.load %arg6[%73, %c0_30] : memref<512x256xf32, #tpu.memory_space<vmem>>, vector<64x256xf32>
    %cst_31 = arith.constant dense<0.000000e+00> : vector<256xf32>
    %75 = vector.multi_reduction <add>, %74, %cst_31 [0] : vector<64x256xf32> to vector<256xf32>
    %76 = vector.shape_cast %75 : vector<256xf32> to vector<1x256xf32>
    %77 = arith.addf %66, %76 : vector<1x256xf32>
    %78 = arith.mulf %74, %74 : vector<64x256xf32>
    %cst_32 = arith.constant dense<0.000000e+00> : vector<256xf32>
    %79 = vector.multi_reduction <add>, %78, %cst_32 [0] : vector<64x256xf32> to vector<256xf32>
    %80 = vector.shape_cast %79 : vector<256xf32> to vector<1x256xf32>
    %81 = arith.addf %70, %80 : vector<1x256xf32>
    %c7_i32 = arith.constant 7 : i32
    %c64_i32_33 = arith.constant 64 : i32
    %82 = arith.muli %c7_i32, %c64_i32_33 : i32
    %83 = tpu.assume_multiple %82, 64 : i32
    %84 = arith.index_cast %83 : i32 to index
    %c0_34 = arith.constant 0 : index
    %85 = vector.load %arg6[%84, %c0_34] : memref<512x256xf32, #tpu.memory_space<vmem>>, vector<64x256xf32>
    %cst_35 = arith.constant dense<0.000000e+00> : vector<256xf32>
    %86 = vector.multi_reduction <add>, %85, %cst_35 [0] : vector<64x256xf32> to vector<256xf32>
    %87 = vector.shape_cast %86 : vector<256xf32> to vector<1x256xf32>
    %88 = arith.addf %77, %87 : vector<1x256xf32>
    %89 = arith.mulf %85, %85 : vector<64x256xf32>
    %cst_36 = arith.constant dense<0.000000e+00> : vector<256xf32>
    %90 = vector.multi_reduction <add>, %89, %cst_36 [0] : vector<64x256xf32> to vector<256xf32>
    %91 = vector.shape_cast %90 : vector<256xf32> to vector<1x256xf32>
    %92 = arith.addf %81, %91 : vector<1x256xf32>
    %c8_i32 = arith.constant 8 : i32
    %cst_37 = arith.constant 0.001953125 : f32
    %93 = vector.broadcast %cst_37 : f32 to vector<1x256xf32>
    %94 = arith.mulf %88, %93 : vector<1x256xf32>
    %cst_38 = arith.constant 0.001953125 : f32
    %95 = vector.broadcast %cst_38 : f32 to vector<1x256xf32>
    %96 = arith.mulf %92, %95 : vector<1x256xf32>
    %97 = arith.mulf %94, %94 : vector<1x256xf32>
    %98 = arith.subf %96, %97 : vector<1x256xf32>
    %cst_39 = arith.constant 0.000000e+00 : f32
    %99 = vector.broadcast %cst_39 : f32 to vector<1x256xf32>
    %100 = arith.maximumf %98, %99 : vector<1x256xf32>
    %cst_40 = arith.constant 9.99999974E-6 : f32
    %101 = vector.broadcast %cst_40 : f32 to vector<1x256xf32>
    %102 = arith.addf %100, %101 : vector<1x256xf32>
    %103 = math.rsqrt %102 : vector<1x256xf32>
    %c0_41 = arith.constant 0 : index
    %c0_42 = arith.constant 0 : index
    %104 = vector.load %arg3[%c0_41, %c0_42] : memref<1x256xf32, #tpu.memory_space<vmem>>, vector<1x256xf32>
    %105 = arith.mulf %103, %104 : vector<1x256xf32>
    %c0_43 = arith.constant 0 : index
    %c0_44 = arith.constant 0 : index
    %106 = vector.load %arg4[%c0_43, %c0_44] : memref<1x256xf32, #tpu.memory_space<vmem>>, vector<1x256xf32>
    %107 = arith.mulf %94, %105 : vector<1x256xf32>
    %108 = arith.subf %106, %107 : vector<1x256xf32>
    %c0_i32_45 = arith.constant 0 : i32
    %c64_i32_46 = arith.constant 64 : i32
    %109 = arith.muli %c0_i32_45, %c64_i32_46 : i32
    %110 = tpu.assume_multiple %109, 64 : i32
    %111 = arith.index_cast %110 : i32 to index
    %c0_47 = arith.constant 0 : index
    %112 = vector.load %arg6[%111, %c0_47] : memref<512x256xf32, #tpu.memory_space<vmem>>, vector<64x256xf32>
    %113 = vector.broadcast %105 : vector<1x256xf32> to vector<64x256xf32>
    %114 = arith.mulf %112, %113 : vector<64x256xf32>
    %115 = vector.broadcast %108 : vector<1x256xf32> to vector<64x256xf32>
    %116 = arith.addf %114, %115 : vector<64x256xf32>
    %cst_48 = arith.constant 0.000000e+00 : f32
    %117 = vector.broadcast %cst_48 : f32 to vector<64x256xf32>
    %118 = arith.maximumf %116, %117 : vector<64x256xf32>
    %119 = arith.index_cast %110 : i32 to index
    %c0_49 = arith.constant 0 : index
    %120 = vector.load %arg5[%119, %c0_49] : memref<512x256xf32, #tpu.memory_space<vmem>>, vector<64x256xf32>
    tpu.vector_store %arg5[%119, %c0_49], %118 {strides = array<i32>} : memref<512x256xf32, #tpu.memory_space<vmem>>, vector<64x256xf32>,
    %c1_i32_50 = arith.constant 1 : i32
    %c64_i32_51 = arith.constant 64 : i32
    %121 = arith.muli %c1_i32_50, %c64_i32_51 : i32
    %122 = tpu.assume_multiple %121, 64 : i32
    %123 = arith.index_cast %122 : i32 to index
    %c0_52 = arith.constant 0 : index
    %124 = vector.load %arg6[%123, %c0_52] : memref<512x256xf32, #tpu.memory_space<vmem>>, vector<64x256xf32>
    %125 = vector.broadcast %105 : vector<1x256xf32> to vector<64x256xf32>
    %126 = arith.mulf %124, %125 : vector<64x256xf32>
    %127 = vector.broadcast %108 : vector<1x256xf32> to vector<64x256xf32>
    %128 = arith.addf %126, %127 : vector<64x256xf32>
    %cst_53 = arith.constant 0.000000e+00 : f32
    %129 = vector.broadcast %cst_53 : f32 to vector<64x256xf32>
    %130 = arith.maximumf %128, %129 : vector<64x256xf32>
    %131 = arith.index_cast %122 : i32 to index
    %c0_54 = arith.constant 0 : index
    %132 = vector.load %arg5[%131, %c0_54] : memref<512x256xf32, #tpu.memory_space<vmem>>, vector<64x256xf32>
    tpu.vector_store %arg5[%131, %c0_54], %130 {strides = array<i32>} : memref<512x256xf32, #tpu.memory_space<vmem>>, vector<64x256xf32>,
    %c2_i32_55 = arith.constant 2 : i32
    %c64_i32_56 = arith.constant 64 : i32
    %133 = arith.muli %c2_i32_55, %c64_i32_56 : i32
    %134 = tpu.assume_multiple %133, 64 : i32
    %135 = arith.index_cast %134 : i32 to index
    %c0_57 = arith.constant 0 : index
    %136 = vector.load %arg6[%135, %c0_57] : memref<512x256xf32, #tpu.memory_space<vmem>>, vector<64x256xf32>
    %137 = vector.broadcast %105 : vector<1x256xf32> to vector<64x256xf32>
    %138 = arith.mulf %136, %137 : vector<64x256xf32>
    %139 = vector.broadcast %108 : vector<1x256xf32> to vector<64x256xf32>
    %140 = arith.addf %138, %139 : vector<64x256xf32>
    %cst_58 = arith.constant 0.000000e+00 : f32
    %141 = vector.broadcast %cst_58 : f32 to vector<64x256xf32>
    %142 = arith.maximumf %140, %141 : vector<64x256xf32>
    %143 = arith.index_cast %134 : i32 to index
    %c0_59 = arith.constant 0 : index
    %144 = vector.load %arg5[%143, %c0_59] : memref<512x256xf32, #tpu.memory_space<vmem>>, vector<64x256xf32>
    tpu.vector_store %arg5[%143, %c0_59], %142 {strides = array<i32>} : memref<512x256xf32, #tpu.memory_space<vmem>>, vector<64x256xf32>,
    %c3_i32_60 = arith.constant 3 : i32
    %c64_i32_61 = arith.constant 64 : i32
    %145 = arith.muli %c3_i32_60, %c64_i32_61 : i32
    %146 = tpu.assume_multiple %145, 64 : i32
    %147 = arith.index_cast %146 : i32 to index
    %c0_62 = arith.constant 0 : index
    %148 = vector.load %arg6[%147, %c0_62] : memref<512x256xf32, #tpu.memory_space<vmem>>, vector<64x256xf32>
    %149 = vector.broadcast %105 : vector<1x256xf32> to vector<64x256xf32>
    %150 = arith.mulf %148, %149 : vector<64x256xf32>
    %151 = vector.broadcast %108 : vector<1x256xf32> to vector<64x256xf32>
    %152 = arith.addf %150, %151 : vector<64x256xf32>
    %cst_63 = arith.constant 0.000000e+00 : f32
    %153 = vector.broadcast %cst_63 : f32 to vector<64x256xf32>
    %154 = arith.maximumf %152, %153 : vector<64x256xf32>
    %155 = arith.index_cast %146 : i32 to index
    %c0_64 = arith.constant 0 : index
    %156 = vector.load %arg5[%155, %c0_64] : memref<512x256xf32, #tpu.memory_space<vmem>>, vector<64x256xf32>
    tpu.vector_store %arg5[%155, %c0_64], %154 {strides = array<i32>} : memref<512x256xf32, #tpu.memory_space<vmem>>, vector<64x256xf32>,
    %c4_i32_65 = arith.constant 4 : i32
    %c64_i32_66 = arith.constant 64 : i32
    %157 = arith.muli %c4_i32_65, %c64_i32_66 : i32
    %158 = tpu.assume_multiple %157, 64 : i32
    %159 = arith.index_cast %158 : i32 to index
    %c0_67 = arith.constant 0 : index
    %160 = vector.load %arg6[%159, %c0_67] : memref<512x256xf32, #tpu.memory_space<vmem>>, vector<64x256xf32>
    %161 = vector.broadcast %105 : vector<1x256xf32> to vector<64x256xf32>
    %162 = arith.mulf %160, %161 : vector<64x256xf32>
    %163 = vector.broadcast %108 : vector<1x256xf32> to vector<64x256xf32>
    %164 = arith.addf %162, %163 : vector<64x256xf32>
    %cst_68 = arith.constant 0.000000e+00 : f32
    %165 = vector.broadcast %cst_68 : f32 to vector<64x256xf32>
    %166 = arith.maximumf %164, %165 : vector<64x256xf32>
    %167 = arith.index_cast %158 : i32 to index
    %c0_69 = arith.constant 0 : index
    %168 = vector.load %arg5[%167, %c0_69] : memref<512x256xf32, #tpu.memory_space<vmem>>, vector<64x256xf32>
    tpu.vector_store %arg5[%167, %c0_69], %166 {strides = array<i32>} : memref<512x256xf32, #tpu.memory_space<vmem>>, vector<64x256xf32>,
    %c5_i32_70 = arith.constant 5 : i32
    %c64_i32_71 = arith.constant 64 : i32
    %169 = arith.muli %c5_i32_70, %c64_i32_71 : i32
    %170 = tpu.assume_multiple %169, 64 : i32
    %171 = arith.index_cast %170 : i32 to index
    %c0_72 = arith.constant 0 : index
    %172 = vector.load %arg6[%171, %c0_72] : memref<512x256xf32, #tpu.memory_space<vmem>>, vector<64x256xf32>
    %173 = vector.broadcast %105 : vector<1x256xf32> to vector<64x256xf32>
    %174 = arith.mulf %172, %173 : vector<64x256xf32>
    %175 = vector.broadcast %108 : vector<1x256xf32> to vector<64x256xf32>
    %176 = arith.addf %174, %175 : vector<64x256xf32>
    %cst_73 = arith.constant 0.000000e+00 : f32
    %177 = vector.broadcast %cst_73 : f32 to vector<64x256xf32>
    %178 = arith.maximumf %176, %177 : vector<64x256xf32>
    %179 = arith.index_cast %170 : i32 to index
    %c0_74 = arith.constant 0 : index
    %180 = vector.load %arg5[%179, %c0_74] : memref<512x256xf32, #tpu.memory_space<vmem>>, vector<64x256xf32>
    tpu.vector_store %arg5[%179, %c0_74], %178 {strides = array<i32>} : memref<512x256xf32, #tpu.memory_space<vmem>>, vector<64x256xf32>,
    %c6_i32_75 = arith.constant 6 : i32
    %c64_i32_76 = arith.constant 64 : i32
    %181 = arith.muli %c6_i32_75, %c64_i32_76 : i32
    %182 = tpu.assume_multiple %181, 64 : i32
    %183 = arith.index_cast %182 : i32 to index
    %c0_77 = arith.constant 0 : index
    %184 = vector.load %arg6[%183, %c0_77] : memref<512x256xf32, #tpu.memory_space<vmem>>, vector<64x256xf32>
    %185 = vector.broadcast %105 : vector<1x256xf32> to vector<64x256xf32>
    %186 = arith.mulf %184, %185 : vector<64x256xf32>
    %187 = vector.broadcast %108 : vector<1x256xf32> to vector<64x256xf32>
    %188 = arith.addf %186, %187 : vector<64x256xf32>
    %cst_78 = arith.constant 0.000000e+00 : f32
    %189 = vector.broadcast %cst_78 : f32 to vector<64x256xf32>
    %190 = arith.maximumf %188, %189 : vector<64x256xf32>
    %191 = arith.index_cast %182 : i32 to index
    %c0_79 = arith.constant 0 : index
    %192 = vector.load %arg5[%191, %c0_79] : memref<512x256xf32, #tpu.memory_space<vmem>>, vector<64x256xf32>
    tpu.vector_store %arg5[%191, %c0_79], %190 {strides = array<i32>} : memref<512x256xf32, #tpu.memory_space<vmem>>, vector<64x256xf32>,
    %c7_i32_80 = arith.constant 7 : i32
    %c64_i32_81 = arith.constant 64 : i32
    %193 = arith.muli %c7_i32_80, %c64_i32_81 : i32
    %194 = tpu.assume_multiple %193, 64 : i32
    %195 = arith.index_cast %194 : i32 to index
    %c0_82 = arith.constant 0 : index
    %196 = vector.load %arg6[%195, %c0_82] : memref<512x256xf32, #tpu.memory_space<vmem>>, vector<64x256xf32>
    %197 = vector.broadcast %105 : vector<1x256xf32> to vector<64x256xf32>
    %198 = arith.mulf %196, %197 : vector<64x256xf32>
    %199 = vector.broadcast %108 : vector<1x256xf32> to vector<64x256xf32>
    %200 = arith.addf %198, %199 : vector<64x256xf32>
    %cst_83 = arith.constant 0.000000e+00 : f32
    %201 = vector.broadcast %cst_83 : f32 to vector<64x256xf32>
    %202 = arith.maximumf %200, %201 : vector<64x256xf32>
    %203 = arith.index_cast %194 : i32 to index
    %c0_84 = arith.constant 0 : index
    %204 = vector.load %arg5[%203, %c0_84] : memref<512x256xf32, #tpu.memory_space<vmem>>, vector<64x256xf32>
    tpu.vector_store %arg5[%203, %c0_84], %202 {strides = array<i32>} : memref<512x256xf32, #tpu.memory_space<vmem>>, vector<64x256xf32>,
    %c8_i32_85 = arith.constant 8 : i32
    return
  }
  func.func @transform_0(%arg0: i32) -> (i32, i32) {
    %c0_i32 = arith.constant 0 : i32
    %c0_i32_0 = arith.constant 0 : i32
    %c0_i32_1 = arith.constant 0 : i32
    return %c0_i32, %c0_i32_0 : i32, i32
  }
  func.func @transform_1(%arg0: i32) -> (i32, i32) {
    %c0_i32 = arith.constant 0 : i32
    %c0_i32_0 = arith.constant 0 : i32
    return %c0_i32, %arg0 : i32, i32
  }
  func.func @transform_2(%arg0: i32) -> (i32, i32) {
    %c0_i32 = arith.constant 0 : i32
    %c0_i32_0 = arith.constant 0 : i32
    return %c0_i32, %arg0 : i32, i32
  }
  func.func @transform_3(%arg0: i32) -> (i32, i32) {
    %c0_i32 = arith.constant 0 : i32
    %c0_i32_0 = arith.constant 0 : i32
    return %c0_i32, %arg0 : i32, i32
  }
  func.func @transform_4(%arg0: i32) -> (i32, i32) {
    %c0_i32 = arith.constant 0 : i32
    %c0_i32_0 = arith.constant 0 : i32
    return %c0_i32, %arg0 : i32, i32
  }
}

</mosaic_0001>

<llo_original>
// kernel: conv_block_forward.1
$region0: #{conv_block_forward.1}
  #allocation0 [shape = 'u32[]', space=smem, size = 0x4, offset = 0x4, fixed_abs, tag = 'smem constant byte address 0x4 - core index']
  #allocation1 [shape = 'u32[144,128]{1,0:T(1,128)}', space=vmem, size = 0x12000, scoped, tag = 'internal scratch']
  #allocation2 [shape = 'f32[512,256]{1,0:T(8,128)}', space=vmem, size = 0x80000, scoped, tag = 'scratch operand']
  %s0 = inlined_call_operand.vmem [shape: bf16[512,128], index: 0, kind: input, shape index: {}]
  %s1 = inlined_call_operand.vmem [shape: bf16[128,256], index: 1, kind: input, shape index: {}]
  %s2 = inlined_call_operand.vmem [shape: f32[1,256], index: 2, kind: input, shape index: {}]
  %s3 = inlined_call_operand.vmem [shape: f32[1,256], index: 3, kind: input, shape index: {}]
  %s4 = inlined_call_operand.hbm [shape: f32[512,256], index: 4, kind: output, shape index: {}]
  %s5 = sld [smem:[#allocation0]]
  $region26: #{conv_block_forward.1} parent=0
    _
  %s7 = ssub.s32 1, %s5
  %s8 = scalar_select 0, %s7, %s5
  $region1: #{conv_block_forward.1} parent=0
    #allocation3 [shape = 'u8[524288]{0}', space=vmem, size = 0x80000, scoped, tag = 'output window, operand 0, single buffered']
    #allocation4 [shape = 's32[1]{0}', space=sflag, size = 0x4, scoped, tag = 'scoped memory for conv_block_forward.1']
    %9 = vsyncpa [#allocation4], 0
    // Predicated region
    $region2: #{conv_block_forward.1} parent=1 // pred_check
      _
    $region3: #{conv_block_forward.1} parent=1 // pred_check_branch
      %11 = sbr.rel (0) target = $region5
    $region4: #{conv_block_forward.1} parent=1 // pred_region
      _
    $region5: #{conv_block_forward.1} parent=1 // pred_fallthru
      _
    // Predicated region
    $region6: #{conv_block_forward.1} parent=1 // pred_check
      _
    $region7: #{conv_block_forward.1} parent=1 // pred_check_branch
      %13 = sbr.rel (0) target = $region9
    $region8: #{conv_block_forward.1} parent=1 // pred_region
      _
    $region9: #{conv_block_forward.1} parent=1 // pred_fallthru
      _
    // Predicated region
    $region10: #{conv_block_forward.1} parent=1 // pred_check
      _
    $region11: #{conv_block_forward.1} parent=1 // pred_check_branch
      %15 = sbr.rel (0) target = $region13
    $region12: #{conv_block_forward.1} parent=1 // pred_region
      _
    $region13: #{conv_block_forward.1} parent=1 // pred_fallthru
      _
    // Predicated region
    $region14: #{conv_block_forward.1} parent=1 // pred_check
      _
    $region15: #{conv_block_forward.1} parent=1 // pred_check_branch
      %17 = sbr.rel (0) target = $region17
    $region16: #{conv_block_forward.1} parent=1 // pred_region
      _
    $region17: #{conv_block_forward.1} parent=1 // pred_fallthru
      _
    %v19 = vld [vmem:[%s0] sm:$0xf]
    %v20 = vld [vmem:[%s0 + $0x4] sm:$0xf]
    %v21 = vld [vmem:[%s0 + $0x8] sm:$0xf]
    %v22 = vld [vmem:[%s0 + $0xc] sm:$0xf]
    %v23 = vld [vmem:[%s0 + $0x10] sm:$0xf]
    %v24 = vld [vmem:[%s0 + $0x14] sm:$0xf]
    %v25 = vld [vmem:[%s0 + $0x18] sm:$0xf]
    %v26 = vld [vmem:[%s0 + $0x1c] sm:$0xf]
    %v27 = vld [vmem:[%s0 + $0x20] sm:$0xf]
    %v28 = vld [vmem:[%s0 + $0x24] sm:$0xf]
    %v29 = vld [vmem:[%s0 + $0x28] sm:$0xf]
    %v30 = vld [vmem:[%s0 + $0x2c] sm:$0xf]
    %v31 = vld [vmem:[%s0 + $0x30] sm:$0xf]
    %v32 = vld [vmem:[%s0 + $0x34] sm:$0xf]
    %v33 = vld [vmem:[%s0 + $0x38] sm:$0xf]
    %v34 = vld [vmem:[%s0 + $0x3c] sm:$0xf]
    %v35 = vld [vmem:[%s0 + $0x40] sm:$0xf]
    %v36 = vld [vmem:[%s0 + $0x44] sm:$0xf]
    %v37 = vld [vmem:[%s0 + $0x48] sm:$0xf]
    %v38 = vld [vmem:[%s0 + $0x4c] sm:$0xf]
    %v39 = vld [vmem:[%s0 + $0x50] sm:$0xf]
    %v40 = vld [vmem:[%s0 + $0x54] sm:$0xf]
    %v41 = vld [vmem:[%s0 + $0x58] sm:$0xf]
    %v42 = vld [vmem:[%s0 + $0x5c] sm:$0xf]
    %v43 = vld [vmem:[%s0 + $0x60] sm:$0xf]
    %v44 = vld [vmem:[%s0 + $0x64] sm:$0xf]
    %v45 = vld [vmem:[%s0 + $0x68] sm:$0xf]
    %v46 = vld [vmem:[%s0 + $0x6c] sm:$0xf]
    %v47 = vld [vmem:[%s0 + $0x70] sm:$0xf]
    %v48 = vld [vmem:[%s0 + $0x74] sm:$0xf]
    %v49 = vld [vmem:[%s0 + $0x78] sm:$0xf]
    %v50 = vld [vmem:[%s0 + $0x7c] sm:$0xf]
    %v51 = vld [vmem:[%s0 + $0x80] sm:$0xf]
    %v52 = vld [vmem:[%s0 + $0x84] sm:$0xf]
    %v53 = vld [vmem:[%s0 + $0x88] sm:$0xf]
    %v54 = vld [vmem:[%s0 + $0x8c] sm:$0xf]
    %v55 = vld [vmem:[%s0 + $0x90] sm:$0xf]
    %v56 = vld [vmem:[%s0 + $0x94] sm:$0xf]
    %v57 = vld [vmem:[%s0 + $0x98] sm:$0xf]
    %v58 = vld [vmem:[%s0 + $0x9c] sm:$0xf]
    %v59 = vld [vmem:[%s0 + $0xa0] sm:$0xf]
    %v60 = vld [vmem:[%s0 + $0xa4] sm:$0xf]
    %v61 = vld [vmem:[%s0 + $0xa8] sm:$0xf]
    %v62 = vld [vmem:[%s0 + $0xac] sm:$0xf]
    %v63 = vld [vmem:[%s0 + $0xb0] sm:$0xf]
    %v64 = vld [vmem:[%s0 + $0xb4] sm:$0xf]
    %v65 = vld [vmem:[%s0 + $0xb8] sm:$0xf]
    %v66 = vld [vmem:[%s0 + $0xbc] sm:$0xf]
    %v67 = vld [vmem:[%s0 + $0xc0] sm:$0xf]
    %v68 = vld [vmem:[%s0 + $0xc4] sm:$0xf]
    %v69 = vld [vmem:[%s0 + $0xc8] sm:$0xf]
    %v70 = vld [vmem:[%s0 + $0xcc] sm:$0xf]
    %v71 = vld [vmem:[%s0 + $0xd0] sm:$0xf]
    %v72 = vld [vmem:[%s0 + $0xd4] sm:$0xf]
    %v73 = vld [vmem:[%s0 + $0xd8] sm:$0xf]
    %v74 = vld [vmem:[%s0 + $0xdc] sm:$0xf]
    %v75 = vld [vmem:[%s0 + $0xe0] sm:$0xf]
    %v76 = vld [vmem:[%s0 + $0xe4] sm:$0xf]
    %v77 = vld [vmem:[%s0 + $0xe8] sm:$0xf]
    %v78 = vld [vmem:[%s0 + $0xec] sm:$0xf]
    %v79 = vld [vmem:[%s0 + $0xf0] sm:$0xf]
    %v80 = vld [vmem:[%s0 + $0xf4] sm:$0xf]
    %v81 = vld [vmem:[%s0 + $0xf8] sm:$0xf]
    %v82 = vld [vmem:[%s0 + $0xfc] sm:$0xf]
    %v83 = vld [vmem:[%s1] sm:$0xff]
    %v84 = vld [vmem:[%s1 + $0x8] sm:$0xff]
    %v85 = vld [vmem:[%s1 + $0x10] sm:$0xff]
    %v86 = vld [vmem:[%s1 + $0x18] sm:$0xff]
    %v87 = vld [vmem:[%s1 + $0x20] sm:$0xff]
    %v88 = vld [vmem:[%s1 + $0x28] sm:$0xff]
    %v89 = vld [vmem:[%s1 + $0x30] sm:$0xff]
    %v90 = vld [vmem:[%s1 + $0x38] sm:$0xff]
    %v91 = vld [vmem:[%s1 + $0x40] sm:$0xff]
    %v92 = vld [vmem:[%s1 + $0x48] sm:$0xff]
    %v93 = vld [vmem:[%s1 + $0x50] sm:$0xff]
    %v94 = vld [vmem:[%s1 + $0x58] sm:$0xff]
    %v95 = vld [vmem:[%s1 + $0x60] sm:$0xff]
    %v96 = vld [vmem:[%s1 + $0x68] sm:$0xff]
    %v97 = vld [vmem:[%s1 + $0x70] sm:$0xff]
    %v98 = vld [vmem:[%s1 + $0x78] sm:$0xff]
    %v163 = vunpack.c.l.b16 %v19
    %v164 = vunpack.c.l.b16 %v20
    %v165 = vunpack.c.l.b16 %v21
    %v166 = vunpack.c.l.b16 %v22
    %v167 = vunpack.c.l.b16 %v23
    %v168 = vunpack.c.l.b16 %v24
    %v169 = vunpack.c.l.b16 %v25
    %v170 = vunpack.c.l.b16 %v26
    %v171 = vunpack.c.l.b16 %v27
    %v172 = vunpack.c.l.b16 %v28
    %v173 = vunpack.c.l.b16 %v29
    %v174 = vunpack.c.l.b16 %v30
    %v175 = vunpack.c.l.b16 %v31
    %v176 = vunpack.c.l.b16 %v32
    %v177 = vunpack.c.l.b16 %v33
    %v178 = vunpack.c.l.b16 %v34
    %v179 = vunpack.c.l.b16 %v35
    %v180 = vunpack.c.l.b16 %v36
    %v181 = vunpack.c.l.b16 %v37
    %v182 = vunpack.c.l.b16 %v38
    %v183 = vunpack.c.l.b16 %v39
    %v184 = vunpack.c.l.b16 %v40
    %v185 = vunpack.c.l.b16 %v41
    %v186 = vunpack.c.l.b16 %v42
    %v187 = vunpack.c.l.b16 %v43
    %v188 = vunpack.c.l.b16 %v44
    %v189 = vunpack.c.l.b16 %v45
    %v190 = vunpack.c.l.b16 %v46
    %v191 = vunpack.c.l.b16 %v47
    %v192 = vunpack.c.l.b16 %v48
    %v193 = vunpack.c.l.b16 %v49
    %v194 = vunpack.c.l.b16 %v50
    %v195 = vunpack.c.l.b16 %v51
    %v196 = vunpack.c.l.b16 %v52
    %v197 = vunpack.c.l.b16 %v53
    %v198 = vunpack.c.l.b16 %v54
    %v199 = vunpack.c.l.b16 %v55
    %v200 = vunpack.c.l.b16 %v56
    %v201 = vunpack.c.l.b16 %v57
    %v202 = vunpack.c.l.b16 %v58
    %v203 = vunpack.c.l.b16 %v59
    %v204 = vunpack.c.l.b16 %v60
    %v205 = vunpack.c.l.b16 %v61
    %v206 = vunpack.c.l.b16 %v62
    %v207 = vunpack.c.l.b16 %v63
    %v208 = vunpack.c.l.b16 %v64
    %v209 = vunpack.c.l.b16 %v65
    %v210 = vunpack.c.l.b16 %v66
    %v211 = vunpack.c.l.b16 %v67
    %v212 = vunpack.c.l.b16 %v68
    %v213 = vunpack.c.l.b16 %v69
    %v214 = vunpack.c.l.b16 %v70
    %v215 = vunpack.c.l.b16 %v71
    %v216 = vunpack.c.l.b16 %v72
    %v217 = vunpack.c.l.b16 %v73
    %v218 = vunpack.c.l.b16 %v74
    %v219 = vunpack.c.l.b16 %v75
    %v220 = vunpack.c.l.b16 %v76
    %v221 = vunpack.c.l.b16 %v77
    %v222 = vunpack.c.l.b16 %v78
    %v223 = vunpack.c.l.b16 %v79
    %v224 = vunpack.c.l.b16 %v80
    %v225 = vunpack.c.l.b16 %v81
    %v226 = vunpack.c.l.b16 %v82
    %v227 = vpack.c.b16 %v164, %v163
    %v228 = vpack.c.b16 %v166, %v165
    %v229 = vpack.c.b16 %v168, %v167
    %v230 = vpack.c.b16 %v170, %v169
    %v231 = vpack.c.b16 %v172, %v171
    %v232 = vpack.c.b16 %v174, %v173
    %v233 = vpack.c.b16 %v176, %v175
    %v234 = vpack.c.b16 %v178, %v177
    %v235 = vpack.c.b16 %v180, %v179
    %v236 = vpack.c.b16 %v182, %v181
    %v237 = vpack.c.b16 %v184, %v183
    %v238 = vpack.c.b16 %v186, %v185
    %v239 = vpack.c.b16 %v188, %v187
    %v240 = vpack.c.b16 %v190, %v189
    %v241 = vpack.c.b16 %v192, %v191
    %v242 = vpack.c.b16 %v194, %v193
    %v243 = vpack.c.b16 %v196, %v195
    %v244 = vpack.c.b16 %v198, %v197
    %v245 = vpack.c.b16 %v200, %v199
    %v246 = vpack.c.b16 %v202, %v201
    %v247 = vpack.c.b16 %v204, %v203
    %v248 = vpack.c.b16 %v206, %v205
    %v249 = vpack.c.b16 %v208, %v207
    %v250 = vpack.c.b16 %v210, %v209
    %v251 = vpack.c.b16 %v212, %v211
    %v252 = vpack.c.b16 %v214, %v213
    %v253 = vpack.c.b16 %v216, %v215
    %v254 = vpack.c.b16 %v218, %v217
    %v255 = vpack.c.b16 %v220, %v219
    %v256 = vpack.c.b16 %v222, %v221
    %v257 = vpack.c.b16 %v224, %v223
    %v258 = vpack.c.b16 %v226, %v225
    %v307 = vunpack.c.l.b16 %v83
    %v308 = vunpack.c.h.b16 %v83
    %v309 = vunpack.c.l.b16 %v84
    %v310 = vunpack.c.h.b16 %v84
    %v311 = vunpack.c.l.b16 %v85
    %v312 = vunpack.c.h.b16 %v85
    %v313 = vunpack.c.l.b16 %v86
    %v314 = vunpack.c.h.b16 %v86
    %v315 = vunpack.c.l.b16 %v87
    %v316 = vunpack.c.h.b16 %v87
    %v317 = vunpack.c.l.b16 %v88
    %v318 = vunpack.c.h.b16 %v88
    %v319 = vunpack.c.l.b16 %v89
    %v320 = vunpack.c.h.b16 %v89
    %v321 = vunpack.c.l.b16 %v90
    %v322 = vunpack.c.h.b16 %v90
    %v323 = vunpack.c.l.b16 %v91
    %v324 = vunpack.c.h.b16 %v91
    %v325 = vunpack.c.l.b16 %v92
    %v326 = vunpack.c.h.b16 %v92
    %v327 = vunpack.c.l.b16 %v93
    %v328 = vunpack.c.h.b16 %v93
    %v329 = vunpack.c.l.b16 %v94
    %v330 = vunpack.c.h.b16 %v94
    %v331 = vunpack.c.l.b16 %v95
    %v332 = vunpack.c.h.b16 %v95
    %v333 = vunpack.c.l.b16 %v96
    %v334 = vunpack.c.h.b16 %v96
    %v335 = vunpack.c.l.b16 %v97
    %v336 = vunpack.c.h.b16 %v97
    %v337 = vunpack.c.l.b16 %v98
    %v338 = vunpack.c.h.b16 %v98
    %v339 = vpack.c.b16 %v309, %v307
    %v340 = vpack.c.b16 %v310, %v308
    %v341 = vpack.c.b16 %v313, %v311
    %v342 = vpack.c.b16 %v314, %v312
    %v343 = vpack.c.b16 %v317, %v315
    %v344 = vpack.c.b16 %v318, %v316
    %v345 = vpack.c.b16 %v321, %v319
    %v346 = vpack.c.b16 %v322, %v320
    %v347 = vpack.c.b16 %v325, %v323
    %v348 = vpack.c.b16 %v326, %v324
    %v349 = vpack.c.b16 %v329, %v327
    %v350 = vpack.c.b16 %v330, %v328
    %v351 = vpack.c.b16 %v333, %v331
    %v352 = vpack.c.b16 %v334, %v332
    %v353 = vpack.c.b16 %v337, %v335
    %v354 = vpack.c.b16 %v338, %v336
    %371 = vmatprep.subr.bf16.mxu0 %v340
    %372 = vmatpush1.bf16.msra.mxu0 %v339
    %373 = vmatprep.subr.bf16.mxu0 %v342
    %374 = vmatpush1.bf16.msra.mxu0 %v341
    %375 = vmatprep.subr.bf16.mxu0 %v344
    %376 = vmatpush1.bf16.msra.mxu0 %v343
    %377 = vmatprep.subr.bf16.mxu0 %v346
    %378 = vmatpush1.bf16.msra.mxu0 %v345
    %379 = vmatprep.subr.bf16.mxu0 %v348
    %380 = vmatpush1.bf16.msra.mxu0 %v347
    %381 = vmatprep.subr.bf16.mxu0 %v350
    %382 = vmatpush1.bf16.msra.mxu0 %v349
    %383 = vmatprep.subr.bf16.mxu0 %v352
    %384 = vmatpush1.bf16.msra.mxu0 %v351
    %385 = vmatprep.subr.bf16.mxu0 %v354
    %386 = vmatpush1.bf16.msra.mxu0 %v353
    %387 = vmatprep.subr.bf16.mxu0 0
    %388 = vmatpush1.bf16.msra.mxu0 0
    %389 = vmatprep.subr.bf16.mxu0 0
    %390 = vmatpush1.bf16.msra.mxu0 0
    %391 = vmatprep.subr.bf16.mxu0 0
    %392 = vmatpush1.bf16.msra.mxu0 0
    %393 = vmatprep.subr.bf16.mxu0 0
    %394 = vmatpush1.bf16.msra.mxu0 0
    %395 = vmatprep.subr.bf16.mxu0 0
    %396 = vmatpush1.bf16.msra.mxu0 0
    %397 = vmatprep.subr.bf16.mxu0 0
    %398 = vmatpush1.bf16.msra.mxu0 0
    %399 = vmatprep.subr.bf16.mxu0 0
    %400 = vmatpush1.bf16.msra.mxu0 0
    %401 = vmatprep.subr.bf16.mxu0 0
    %402 = vmatpush1.bf16.msra.mxu0 0
    %403 = vmatprep.mubr.bf16.mxu0 0
    %404 = vmatmul.mubr.bf16.gmra.mrb[0].mxu0 %v227
    %v405 = vpop.f32.mrb[0].mxu0
    %v406 = vadd.f32 0.0, %v405
    %v407 = vpop.f32.mrb[0].mxu0
    %v408 = vadd.f32 0.0, %v407
    %v409 = vpop.f32.mrb[0].mxu0
    %v410 = vadd.f32 0.0, %v409
    %v411 = vpop.f32.mrb[0].mxu0
    %v412 = vadd.f32 0.0, %v411
    %413 = vmatprep.mubr.bf16.mxu0 0
    %414 = vmatmul.mubr.bf16.gmra.mrb[0].mxu0 %v228
    %v415 = vpop.f32.mrb[0].mxu0
    %v416 = vadd.f32 0.0, %v415
    %v417 = vpop.f32.mrb[0].mxu0
    %v418 = vadd.f32 0.0, %v417
    %v419 = vpop.f32.mrb[0].mxu0
    %v420 = vadd.f32 0.0, %v419
    %v421 = vpop.f32.mrb[0].mxu0
    %v422 = vadd.f32 0.0, %v421
    %423 = vmatprep.mubr.bf16.mxu0 0
    %424 = vmatmul.mubr.bf16.gmra.mrb[0].mxu0 %v229
    %v425 = vpop.f32.mrb[0].mxu0
    %v426 = vadd.f32 0.0, %v425
    %v427 = vpop.f32.mrb[0].mxu0
    %v428 = vadd.f32 0.0, %v427
    %v429 = vpop.f32.mrb[0].mxu0
    %v430 = vadd.f32 0.0, %v429
    %v431 = vpop.f32.mrb[0].mxu0
    %v432 = vadd.f32 0.0, %v431
    %433 = vmatprep.mubr.bf16.mxu0 0
    %434 = vmatmul.mubr.bf16.gmra.mrb[0].mxu0 %v230
    %v435 = vpop.f32.mrb[0].mxu0
    %v436 = vadd.f32 0.0, %v435
    %v437 = vpop.f32.mrb[0].mxu0
    %v438 = vadd.f32 0.0, %v437
    %v439 = vpop.f32.mrb[0].mxu0
    %v440 = vadd.f32 0.0, %v439
    %v441 = vpop.f32.mrb[0].mxu0
    %v442 = vadd.f32 0.0, %v441
    %443 = vmatprep.mubr.bf16.mxu0 0
    %444 = vmatmul.mubr.bf16.gmra.mrb[0].mxu0 %v231
    %v445 = vpop.f32.mrb[0].mxu0
    %v446 = vadd.f32 0.0, %v445
    %v447 = vpop.f32.mrb[0].mxu0
    %v448 = vadd.f32 0.0, %v447
    %v449 = vpop.f32.mrb[0].mxu0
    %v450 = vadd.f32 0.0, %v449
    %v451 = vpop.f32.mrb[0].mxu0
    %v452 = vadd.f32 0.0, %v451
    %453 = vmatprep.mubr.bf16.mxu0 0
    %454 = vmatmul.mubr.bf16.gmra.mrb[0].mxu0 %v232
    %v455 = vpop.f32.mrb[0].mxu0
    %v456 = vadd.f32 0.0, %v455
    %v457 = vpop.f32.mrb[0].mxu0
    %v458 = vadd.f32 0.0, %v457
    %v459 = vpop.f32.mrb[0].mxu0
    %v460 = vadd.f32 0.0, %v459
    %v461 = vpop.f32.mrb[0].mxu0
    %v462 = vadd.f32 0.0, %v461
    %463 = vmatprep.mubr.bf16.mxu0 0
    %464 = vmatmul.mubr.bf16.gmra.mrb[0].mxu0 %v233
    %v465 = vpop.f32.mrb[0].mxu0
    %v466 = vadd.f32 0.0, %v465
    %v467 = vpop.f32.mrb[0].mxu0
    %v468 = vadd.f32 0.0, %v467
    %v469 = vpop.f32.mrb[0].mxu0
    %v470 = vadd.f32 0.0, %v469
    %v471 = vpop.f32.mrb[0].mxu0
    %v472 = vadd.f32 0.0, %v471
    %473 = vmatprep.mubr.bf16.mxu0 0
    %474 = vmatmul.mubr.bf16.gmra.mrb[0].mxu0 %v234
    %v475 = vpop.f32.mrb[0].mxu0
    %v476 = vadd.f32 0.0, %v475
    %v477 = vpop.f32.mrb[0].mxu0
    %v478 = vadd.f32 0.0, %v477
    %v479 = vpop.f32.mrb[0].mxu0
    %v480 = vadd.f32 0.0, %v479
    %v481 = vpop.f32.mrb[0].mxu0
    %v482 = vadd.f32 0.0, %v481
    %483 = vmatprep.mubr.bf16.mxu0 0
    %484 = vmatmul.mubr.bf16.gmra.mrb[0].mxu0 %v235
    %v485 = vpop.f32.mrb[0].mxu0
    %v486 = vadd.f32 0.0, %v485
    %v487 = vpop.f32.mrb[0].mxu0
    %v488 = vadd.f32 0.0, %v487
    %v489 = vpop.f32.mrb[0].mxu0
    %v490 = vadd.f32 0.0, %v489
    %v491 = vpop.f32.mrb[0].mxu0
    %v492 = vadd.f32 0.0, %v491
    %493 = vmatprep.mubr.bf16.mxu0 0
    %494 = vmatmul.mubr.bf16.gmra.mrb[0].mxu0 %v236
    %v495 = vpop.f32.mrb[0].mxu0
    %v496 = vadd.f32 0.0, %v495
    %v497 = vpop.f32.mrb[0].mxu0
    %v498 = vadd.f32 0.0, %v497
    %v499 = vpop.f32.mrb[0].mxu0
    %v500 = vadd.f32 0.0, %v499
    %v501 = vpop.f32.mrb[0].mxu0
    %v502 = vadd.f32 0.0, %v501
    %503 = vmatprep.mubr.bf16.mxu0 0
    %504 = vmatmul.mubr.bf16.gmra.mrb[0].mxu0 %v237
    %v505 = vpop.f32.mrb[0].mxu0
    %v506 = vadd.f32 0.0, %v505
    %v507 = vpop.f32.mrb[0].mxu0
    %v508 = vadd.f32 0.0, %v507
    %v509 = vpop.f32.mrb[0].mxu0
    %v510 = vadd.f32 0.0, %v509
    %v511 = vpop.f32.mrb[0].mxu0
    %v512 = vadd.f32 0.0, %v511
    %513 = vmatprep.mubr.bf16.mxu0 0
    %514 = vmatmul.mubr.bf16.gmra.mrb[0].mxu0 %v238
    %v515 = vpop.f32.mrb[0].mxu0
    %v516 = vadd.f32 0.0, %v515
    %v517 = vpop.f32.mrb[0].mxu0
    %v518 = vadd.f32 0.0, %v517
    %v519 = vpop.f32.mrb[0].mxu0
    %v520 = vadd.f32 0.0, %v519
    %v521 = vpop.f32.mrb[0].mxu0
    %v522 = vadd.f32 0.0, %v521
    %523 = vmatprep.mubr.bf16.mxu0 0
    %524 = vmatmul.mubr.bf16.gmra.mrb[0].mxu0 %v239
    %v525 = vpop.f32.mrb[0].mxu0
    %v526 = vadd.f32 0.0, %v525
    %v527 = vpop.f32.mrb[0].mxu0
    %v528 = vadd.f32 0.0, %v527
    %v529 = vpop.f32.mrb[0].mxu0
    %v530 = vadd.f32 0.0, %v529
    %v531 = vpop.f32.mrb[0].mxu0
    %v532 = vadd.f32 0.0, %v531
    %533 = vmatprep.mubr.bf16.mxu0 0
    %534 = vmatmul.mubr.bf16.gmra.mrb[0].mxu0 %v240
    %v535 = vpop.f32.mrb[0].mxu0
    %v536 = vadd.f32 0.0, %v535
    %v537 = vpop.f32.mrb[0].mxu0
    %v538 = vadd.f32 0.0, %v537
    %v539 = vpop.f32.mrb[0].mxu0
    %v540 = vadd.f32 0.0, %v539
    %v541 = vpop.f32.mrb[0].mxu0
    %v542 = vadd.f32 0.0, %v541
    %543 = vmatprep.mubr.bf16.mxu0 0
    %544 = vmatmul.mubr.bf16.gmra.mrb[0].mxu0 %v241
    %v545 = vpop.f32.mrb[0].mxu0
    %v546 = vadd.f32 0.0, %v545
    %v547 = vpop.f32.mrb[0].mxu0
    %v548 = vadd.f32 0.0, %v547
    %v549 = vpop.f32.mrb[0].mxu0
    %v550 = vadd.f32 0.0, %v549
    %v551 = vpop.f32.mrb[0].mxu0
    %v552 = vadd.f32 0.0, %v551
    %553 = vmatprep.mubr.bf16.mxu0 0
    %554 = vmatmul.mubr.bf16.gmra.mrb[0].mxu0 %v242
    %v555 = vpop.f32.mrb[0].mxu0
    %v556 = vadd.f32 0.0, %v555
    %v557 = vpop.f32.mrb[0].mxu0
    %v558 = vadd.f32 0.0, %v557
    %v559 = vpop.f32.mrb[0].mxu0
    %v560 = vadd.f32 0.0, %v559
    %v561 = vpop.f32.mrb[0].mxu0
    %v562 = vadd.f32 0.0, %v561
    %563 = vmatprep.mubr.bf16.mxu0 0
    %564 = vmatmul.mubr.bf16.gmra.mrb[0].mxu0 %v243
    %v565 = vpop.f32.mrb[0].mxu0
    %v566 = vadd.f32 0.0, %v565
    %v567 = vpop.f32.mrb[0].mxu0
    %v568 = vadd.f32 0.0, %v567
    %v569 = vpop.f32.mrb[0].mxu0
    %v570 = vadd.f32 0.0, %v569
    %v571 = vpop.f32.mrb[0].mxu0
    %v572 = vadd.f32 0.0, %v571
    %573 = vmatprep.mubr.bf16.mxu0 0
    %574 = vmatmul.mubr.bf16.gmra.mrb[0].mxu0 %v244
    %v575 = vpop.f32.mrb[0].mxu0
    %v576 = vadd.f32 0.0, %v575
    %v577 = vpop.f32.mrb[0].mxu0
    %v578 = vadd.f32 0.0, %v577
    %v579 = vpop.f32.mrb[0].mxu0
    %v580 = vadd.f32 0.0, %v579
    %v581 = vpop.f32.mrb[0].mxu0
    %v582 = vadd.f32 0.0, %v581
    %583 = vmatprep.mubr.bf16.mxu0 0
    %584 = vmatmul.mubr.bf16.gmra.mrb[0].mxu0 %v245
    %v585 = vpop.f32.mrb[0].mxu0
    %v586 = vadd.f32 0.0, %v585
    %v587 = vpop.f32.mrb[0].mxu0
    %v588 = vadd.f32 0.0, %v587
    %v589 = vpop.f32.mrb[0].mxu0
    %v590 = vadd.f32 0.0, %v589
    %v591 = vpop.f32.mrb[0].mxu0
    %v592 = vadd.f32 0.0, %v591
    %593 = vmatprep.mubr.bf16.mxu0 0
    %594 = vmatmul.mubr.bf16.gmra.mrb[0].mxu0 %v246
    %v595 = vpop.f32.mrb[0].mxu0
    %v596 = vadd.f32 0.0, %v595
    %v597 = vpop.f32.mrb[0].mxu0
    %v598 = vadd.f32 0.0, %v597
    %v599 = vpop.f32.mrb[0].mxu0
    %v600 = vadd.f32 0.0, %v599
    %v601 = vpop.f32.mrb[0].mxu0
    %v602 = vadd.f32 0.0, %v601
    %603 = vmatprep.mubr.bf16.mxu0 0
    %604 = vmatmul.mubr.bf16.gmra.mrb[0].mxu0 %v247
    %v605 = vpop.f32.mrb[0].mxu0
    %v606 = vadd.f32 0.0, %v605
    %v607 = vpop.f32.mrb[0].mxu0
    %v608 = vadd.f32 0.0, %v607
    %v609 = vpop.f32.mrb[0].mxu0
    %v610 = vadd.f32 0.0, %v609
    %v611 = vpop.f32.mrb[0].mxu0
    %v612 = vadd.f32 0.0, %v611
    %613 = vmatprep.mubr.bf16.mxu0 0
    %614 = vmatmul.mubr.bf16.gmra.mrb[0].mxu0 %v248
    %v615 = vpop.f32.mrb[0].mxu0
    %v616 = vadd.f32 0.0, %v615
    %v617 = vpop.f32.mrb[0].mxu0
    %v618 = vadd.f32 0.0, %v617
    %v619 = vpop.f32.mrb[0].mxu0
    %v620 = vadd.f32 0.0, %v619
    %v621 = vpop.f32.mrb[0].mxu0
    %v622 = vadd.f32 0.0, %v621
    %623 = vmatprep.mubr.bf16.mxu0 0
    %624 = vmatmul.mubr.bf16.gmra.mrb[0].mxu0 %v249
    %v625 = vpop.f32.mrb[0].mxu0
    %v626 = vadd.f32 0.0, %v625
    %v627 = vpop.f32.mrb[0].mxu0
    %v628 = vadd.f32 0.0, %v627
    %v629 = vpop.f32.mrb[0].mxu0
    %v630 = vadd.f32 0.0, %v629
    %v631 = vpop.f32.mrb[0].mxu0
    %v632 = vadd.f32 0.0, %v631
    %633 = vmatprep.mubr.bf16.mxu0 0
    %634 = vmatmul.mubr.bf16.gmra.mrb[0].mxu0 %v250
    %v635 = vpop.f32.mrb[0].mxu0
    %v636 = vadd.f32 0.0, %v635
    %v637 = vpop.f32.mrb[0].mxu0
    %v638 = vadd.f32 0.0, %v637
    %v639 = vpop.f32.mrb[0].mxu0
    %v640 = vadd.f32 0.0, %v639
    %v641 = vpop.f32.mrb[0].mxu0
    %v642 = vadd.f32 0.0, %v641
    %643 = vmatprep.mubr.bf16.mxu0 0
    %644 = vmatmul.mubr.bf16.gmra.mrb[0].mxu0 %v251
    %v645 = vpop.f32.mrb[0].mxu0
    %v646 = vadd.f32 0.0, %v645
    %v647 = vpop.f32.mrb[0].mxu0
    %v648 = vadd.f32 0.0, %v647
    %v649 = vpop.f32.mrb[0].mxu0
    %v650 = vadd.f32 0.0, %v649
    %v651 = vpop.f32.mrb[0].mxu0
    %v652 = vadd.f32 0.0, %v651
    %653 = vmatprep.mubr.bf16.mxu0 0
    %654 = vmatmul.mubr.bf16.gmra.mrb[0].mxu0 %v252
    %v655 = vpop.f32.mrb[0].mxu0
    %v656 = vadd.f32 0.0, %v655
    %v657 = vpop.f32.mrb[0].mxu0
    %v658 = vadd.f32 0.0, %v657
    %v659 = vpop.f32.mrb[0].mxu0
    %v660 = vadd.f32 0.0, %v659
    %v661 = vpop.f32.mrb[0].mxu0
    %v662 = vadd.f32 0.0, %v661
    %663 = vmatprep.mubr.bf16.mxu0 0
    %664 = vmatmul.mubr.bf16.gmra.mrb[0].mxu0 %v253
    %v665 = vpop.f32.mrb[0].mxu0
    %v666 = vadd.f32 0.0, %v665
    %v667 = vpop.f32.mrb[0].mxu0
    %v668 = vadd.f32 0.0, %v667
    %v669 = vpop.f32.mrb[0].mxu0
    %v670 = vadd.f32 0.0, %v669
    %v671 = vpop.f32.mrb[0].mxu0
    %v672 = vadd.f32 0.0, %v671
    %673 = vmatprep.mubr.bf16.mxu0 0
    %674 = vmatmul.mubr.bf16.gmra.mrb[0].mxu0 %v254
    %v675 = vpop.f32.mrb[0].mxu0
    %v676 = vadd.f32 0.0, %v675
    %v677 = vpop.f32.mrb[0].mxu0
    %v678 = vadd.f32 0.0, %v677
    %v679 = vpop.f32.mrb[0].mxu0
    %v680 = vadd.f32 0.0, %v679
    %v681 = vpop.f32.mrb[0].mxu0
    %v682 = vadd.f32 0.0, %v681
    %683 = vmatprep.mubr.bf16.mxu0 0
    %684 = vmatmul.mubr.bf16.gmra.mrb[0].mxu0 %v255
    %v685 = vpop.f32.mrb[0].mxu0
    %v686 = vadd.f32 0.0, %v685
    %v687 = vpop.f32.mrb[0].mxu0
    %v688 = vadd.f32 0.0, %v687
    %v689 = vpop.f32.mrb[0].mxu0
    %v690 = vadd.f32 0.0, %v689
    %v691 = vpop.f32.mrb[0].mxu0
    %v692 = vadd.f32 0.0, %v691
    %693 = vmatprep.mubr.bf16.mxu0 0
    %694 = vmatmul.mubr.bf16.gmra.mrb[0].mxu0 %v256
    %v695 = vpop.f32.mrb[0].mxu0
    %v696 = vadd.f32 0.0, %v695
    %v697 = vpop.f32.mrb[0].mxu0
    %v698 = vadd.f32 0.0, %v697
    %v699 = vpop.f32.mrb[0].mxu0
    %v700 = vadd.f32 0.0, %v699
    %v701 = vpop.f32.mrb[0].mxu0
    %v702 = vadd.f32 0.0, %v701
    %703 = vmatprep.mubr.bf16.mxu0 0
    %704 = vmatmul.mubr.bf16.gmra.mrb[0].mxu0 %v257
    %v705 = vpop.f32.mrb[0].mxu0
    %v706 = vadd.f32 0.0, %v705
    %v707 = vpop.f32.mrb[0].mxu0
    %v708 = vadd.f32 0.0, %v707
    %v709 = vpop.f32.mrb[0].mxu0
    %v710 = vadd.f32 0.0, %v709
    %v711 = vpop.f32.mrb[0].mxu0
    %v712 = vadd.f32 0.0, %v711
    %713 = vmatprep.mubr.bf16.mxu0 0
    %714 = vmatmul.mubr.bf16.gmra.mrb[0].mxu0 %v258
    %v715 = vpop.f32.mrb[0].mxu0
    %v716 = vadd.f32 0.0, %v715
    %v717 = vpop.f32.mrb[0].mxu0
    %v718 = vadd.f32 0.0, %v717
    %v719 = vpop.f32.mrb[0].mxu0
    %v720 = vadd.f32 0.0, %v719
    %v721 = vpop.f32.mrb[0].mxu0
    %v722 = vadd.f32 0.0, %v721
    %723 = vdwg.mxu0
    %724 = vst [vmem:[#allocation2] sm:$0xff] %v406
    %725 = vst [vmem:[#allocation2 + $0x8] sm:$0xff] %v408
    %726 = vst [vmem:[#allocation2 + $0x10] sm:$0xff] %v410
    %727 = vst [vmem:[#allocation2 + $0x18] sm:$0xff] %v412
    %728 = vst [vmem:[#allocation2 + $0x20] sm:$0xff] %v416
    %729 = vst [vmem:[#allocation2 + $0x28] sm:$0xff] %v418
    %730 = vst [vmem:[#allocation2 + $0x30] sm:$0xff] %v420
    %731 = vst [vmem:[#allocation2 + $0x38] sm:$0xff] %v422
    %732 = vst [vmem:[#allocation2 + $0x40] sm:$0xff] %v426
    %733 = vst [vmem:[#allocation2 + $0x48] sm:$0xff] %v428
    %734 = vst [vmem:[#allocation2 + $0x50] sm:$0xff] %v430
    %735 = vst [vmem:[#allocation2 + $0x58] sm:$0xff] %v432
    %736 = vst [vmem:[#allocation2 + $0x60] sm:$0xff] %v436
    %737 = vst [vmem:[#allocation2 + $0x68] sm:$0xff] %v438
    %738 = vst [vmem:[#allocation2 + $0x70] sm:$0xff] %v440
    %739 = vst [vmem:[#allocation2 + $0x78] sm:$0xff] %v442
    %740 = vst [vmem:[#allocation2 + $0x80] sm:$0xff] %v446
    %741 = vst [vmem:[#allocation2 + $0x88] sm:$0xff] %v448
    %742 = vst [vmem:[#allocation2 + $0x90] sm:$0xff] %v450
    %743 = vst [vmem:[#allocation2 + $0x98] sm:$0xff] %v452
    %744 = vst [vmem:[#allocation2 + $0xa0] sm:$0xff] %v456
    %745 = vst [vmem:[#allocation2 + $0xa8] sm:$0xff] %v458
    %746 = vst [vmem:[#allocation2 + $0xb0] sm:$0xff] %v460
    %747 = vst [vmem:[#allocation2 + $0xb8] sm:$0xff] %v462
    %748 = vst [vmem:[#allocation2 + $0xc0] sm:$0xff] %v466
    %749 = vst [vmem:[#allocation2 + $0xc8] sm:$0xff] %v468
    %750 = vst [vmem:[#allocation2 + $0xd0] sm:$0xff] %v470
    %751 = vst [vmem:[#allocation2 + $0xd8] sm:$0xff] %v472
    %752 = vst [vmem:[#allocation2 + $0xe0] sm:$0xff] %v476
    %753 = vst [vmem:[#allocation2 + $0xe8] sm:$0xff] %v478
    %754 = vst [vmem:[#allocation2 + $0xf0] sm:$0xff] %v480
    %755 = vst [vmem:[#allocation2 + $0xf8] sm:$0xff] %v482
    %756 = vst [vmem:[#allocation2 + $0x100] sm:$0xff] %v486
    %757 = vst [vmem:[#allocation2 + $0x108] sm:$0xff] %v488
    %758 = vst [vmem:[#allocation2 + $0x110] sm:$0xff] %v490
    %759 = vst [vmem:[#allocation2 + $0x118] sm:$0xff] %v492
    %760 = vst [vmem:[#allocation2 + $0x120] sm:$0xff] %v496
    %761 = vst [vmem:[#allocation2 + $0x128] sm:$0xff] %v498
    %762 = vst [vmem:[#allocation2 + $0x130] sm:$0xff] %v500
    %763 = vst [vmem:[#allocation2 + $0x138] sm:$0xff] %v502
    %764 = vst [vmem:[#allocation2 + $0x140] sm:$0xff] %v506
    %765 = vst [vmem:[#allocation2 + $0x148] sm:$0xff] %v508
    %766 = vst [vmem:[#allocation2 + $0x150] sm:$0xff] %v510
    %767 = vst [vmem:[#allocation2 + $0x158] sm:$0xff] %v512
    %768 = vst [vmem:[#allocation2 + $0x160] sm:$0xff] %v516
    %769 = vst [vmem:[#allocation2 + $0x168] sm:$0xff] %v518
    %770 = vst [vmem:[#allocation2 + $0x170] sm:$0xff] %v520
    %771 = vst [vmem:[#allocation2 + $0x178] sm:$0xff] %v522
    %772 = vst [vmem:[#allocation2 + $0x180] sm:$0xff] %v526
    %773 = vst [vmem:[#allocation2 + $0x188] sm:$0xff] %v528
    %774 = vst [vmem:[#allocation2 + $0x190] sm:$0xff] %v530
    %775 = vst [vmem:[#allocation2 + $0x198] sm:$0xff] %v532
    %776 = vst [vmem:[#allocation2 + $0x1a0] sm:$0xff] %v536
    %777 = vst [vmem:[#allocation2 + $0x1a8] sm:$0xff] %v538
    %778 = vst [vmem:[#allocation2 + $0x1b0] sm:$0xff] %v540
    %779 = vst [vmem:[#allocation2 + $0x1b8] sm:$0xff] %v542
    %780 = vst [vmem:[#allocation2 + $0x1c0] sm:$0xff] %v546
    %781 = vst [vmem:[#allocation2 + $0x1c8] sm:$0xff] %v548
    %782 = vst [vmem:[#allocation2 + $0x1d0] sm:$0xff] %v550
    %783 = vst [vmem:[#allocation2 + $0x1d8] sm:$0xff] %v552
    %784 = vst [vmem:[#allocation2 + $0x1e0] sm:$0xff] %v556
    %785 = vst [vmem:[#allocation2 + $0x1e8] sm:$0xff] %v558
    %786 = vst [vmem:[#allocation2 + $0x1f0] sm:$0xff] %v560
    %787 = vst [vmem:[#allocation2 + $0x1f8] sm:$0xff] %v562
    %788 = vst [vmem:[#allocation2 + $0x200] sm:$0xff] %v566
    %789 = vst [vmem:[#allocation2 + $0x208] sm:$0xff] %v568
    %790 = vst [vmem:[#allocation2 + $0x210] sm:$0xff] %v570
    %791 = vst [vmem:[#allocation2 + $0x218] sm:$0xff] %v572
    %792 = vst [vmem:[#allocation2 + $0x220] sm:$0xff] %v576
    %793 = vst [vmem:[#allocation2 + $0x228] sm:$0xff] %v578
    %794 = vst [vmem:[#allocation2 + $0x230] sm:$0xff] %v580
    %795 = vst [vmem:[#allocation2 + $0x238] sm:$0xff] %v582
    %796 = vst [vmem:[#allocation2 + $0x240] sm:$0xff] %v586
    %797 = vst [vmem:[#allocation2 + $0x248] sm:$0xff] %v588
    %798 = vst [vmem:[#allocation2 + $0x250] sm:$0xff] %v590
    %799 = vst [vmem:[#allocation2 + $0x258] sm:$0xff] %v592
    %800 = vst [vmem:[#allocation2 + $0x260] sm:$0xff] %v596
    %801 = vst [vmem:[#allocation2 + $0x268] sm:$0xff] %v598
    %802 = vst [vmem:[#allocation2 + $0x270] sm:$0xff] %v600
    %803 = vst [vmem:[#allocation2 + $0x278] sm:$0xff] %v602
    %804 = vst [vmem:[#allocation2 + $0x280] sm:$0xff] %v606
    %805 = vst [vmem:[#allocation2 + $0x288] sm:$0xff] %v608
    %806 = vst [vmem:[#allocation2 + $0x290] sm:$0xff] %v610
    %807 = vst [vmem:[#allocation2 + $0x298] sm:$0xff] %v612
    %808 = vst [vmem:[#allocation2 + $0x2a0] sm:$0xff] %v616
    %809 = vst [vmem:[#allocation2 + $0x2a8] sm:$0xff] %v618
    %810 = vst [vmem:[#allocation2 + $0x2b0] sm:$0xff] %v620
    %811 = vst [vmem:[#allocation2 + $0x2b8] sm:$0xff] %v622
    %812 = vst [vmem:[#allocation2 + $0x2c0] sm:$0xff] %v626
    %813 = vst [vmem:[#allocation2 + $0x2c8] sm:$0xff] %v628
    %814 = vst [vmem:[#allocation2 + $0x2d0] sm:$0xff] %v630
    %815 = vst [vmem:[#allocation2 + $0x2d8] sm:$0xff] %v632
    %816 = vst [vmem:[#allocation2 + $0x2e0] sm:$0xff] %v636
    %817 = vst [vmem:[#allocation2 + $0x2e8] sm:$0xff] %v638
    %818 = vst [vmem:[#allocation2 + $0x2f0] sm:$0xff] %v640
    %819 = vst [vmem:[#allocation2 + $0x2f8] sm:$0xff] %v642
    %820 = vst [vmem:[#allocation2 + $0x300] sm:$0xff] %v646
    %821 = vst [vmem:[#allocation2 + $0x308] sm:$0xff] %v648
    %822 = vst [vmem:[#allocation2 + $0x310] sm:$0xff] %v650
    %823 = vst [vmem:[#allocation2 + $0x318] sm:$0xff] %v652
    %824 = vst [vmem:[#allocation2 + $0x320] sm:$0xff] %v656
    %825 = vst [vmem:[#allocation2 + $0x328] sm:$0xff] %v658
    %826 = vst [vmem:[#allocation2 + $0x330] sm:$0xff] %v660
    %827 = vst [vmem:[#allocation2 + $0x338] sm:$0xff] %v662
    %828 = vst [vmem:[#allocation2 + $0x340] sm:$0xff] %v666
    %829 = vst [vmem:[#allocation2 + $0x348] sm:$0xff] %v668
    %830 = vst [vmem:[#allocation2 + $0x350] sm:$0xff] %v670
    %831 = vst [vmem:[#allocation2 + $0x358] sm:$0xff] %v672
    %832 = vst [vmem:[#allocation2 + $0x360] sm:$0xff] %v676
    %833 = vst [vmem:[#allocation2 + $0x368] sm:$0xff] %v678
    %834 = vst [vmem:[#allocation2 + $0x370] sm:$0xff] %v680
    %835 = vst [vmem:[#allocation2 + $0x378] sm:$0xff] %v682
    %836 = vst [vmem:[#allocation2 + $0x380] sm:$0xff] %v686
    %837 = vst [vmem:[#allocation2 + $0x388] sm:$0xff] %v688
    %838 = vst [vmem:[#allocation2 + $0x390] sm:$0xff] %v690
    %839 = vst [vmem:[#allocation2 + $0x398] sm:$0xff] %v692
    %840 = vst [vmem:[#allocation2 + $0x3a0] sm:$0xff] %v696
    %841 = vst [vmem:[#allocation2 + $0x3a8] sm:$0xff] %v698
    %842 = vst [vmem:[#allocation2 + $0x3b0] sm:$0xff] %v700
    %843 = vst [vmem:[#allocation2 + $0x3b8] sm:$0xff] %v702
    %844 = vst [vmem:[#allocation2 + $0x3c0] sm:$0xff] %v706
    %845 = vst [vmem:[#allocation2 + $0x3c8] sm:$0xff] %v708
    %846 = vst [vmem:[#allocation2 + $0x3d0] sm:$0xff] %v710
    %847 = vst [vmem:[#allocation2 + $0x3d8] sm:$0xff] %v712
    %848 = vst [vmem:[#allocation2 + $0x3e0] sm:$0xff] %v716
    %849 = vst [vmem:[#allocation2 + $0x3e8] sm:$0xff] %v718
    %850 = vst [vmem:[#allocation2 + $0x3f0] sm:$0xff] %v720
    %851 = vst [vmem:[#allocation2 + $0x3f8] sm:$0xff] %v722
    %s852 = smul.u32 0, 2
    %s853 = smul.addr %s852, 8
    %s854 = scalar_lea.vmem [#allocation2], %s853
    %v855 = vld [vmem:[%s854] sm:$0xff]
    %v856 = vld [vmem:[%s854 + $0x8] sm:$0xff]
    %v857 = vld [vmem:[%s854 + $0x10] sm:$0xff]
    %v858 = vld [vmem:[%s854 + $0x18] sm:$0xff]
    %v859 = vld [vmem:[%s854 + $0x20] sm:$0xff]
    %v860 = vld [vmem:[%s854 + $0x28] sm:$0xff]
    %v861 = vld [vmem:[%s854 + $0x30] sm:$0xff]
    %v862 = vld [vmem:[%s854 + $0x38] sm:$0xff]
    %v863 = vld [vmem:[%s854 + $0x40] sm:$0xff]
    %v864 = vld [vmem:[%s854 + $0x48] sm:$0xff]
    %v865 = vld [vmem:[%s854 + $0x50] sm:$0xff]
    %v866 = vld [vmem:[%s854 + $0x58] sm:$0xff]
    %v867 = vld [vmem:[%s854 + $0x60] sm:$0xff]
    %v868 = vld [vmem:[%s854 + $0x68] sm:$0xff]
    %v869 = vld [vmem:[%s854 + $0x70] sm:$0xff]
    %v870 = vld [vmem:[%s854 + $0x78] sm:$0xff]
    %v871 = vadd.f32 %v855, %v857
    %v872 = vadd.f32 %v871, %v859
    %v873 = vadd.f32 %v872, %v861
    %v874 = vadd.f32 %v873, %v863
    %v875 = vadd.f32 %v874, %v865
    %v876 = vadd.f32 %v875, %v867
    %v877 = vadd.f32 %v876, %v869
    %v878 = vrot.slane %v877, 4
    %v879 = vadd.f32 %v877, %v878
    %v880 = vrot.slane %v879, 2
    %v881 = vadd.f32 %v879, %v880
    %v882 = vrot.slane %v881, 1
    %v883 = vadd.f32 %v881, %v882
    %v884 = vadd.f32 %v856, %v858
    %v885 = vadd.f32 %v884, %v860
    %v886 = vadd.f32 %v885, %v862
    %v887 = vadd.f32 %v886, %v864
    %v888 = vadd.f32 %v887, %v866
    %v889 = vadd.f32 %v888, %v868
    %v890 = vadd.f32 %v889, %v870
    %v891 = vrot.slane %v890, 4
    %v892 = vadd.f32 %v890, %v891
    %v893 = vrot.slane %v892, 2
    %v894 = vadd.f32 %v892, %v893
    %v895 = vrot.slane %v894, 1
    %v896 = vadd.f32 %v894, %v895
    %v897 = vadd.f32 %v883, 0.0
    %v898 = vadd.f32 %v896, 0.0
    %v899 = vmul.f32 %v855, %v855
    %v900 = vmul.f32 %v856, %v856
    %v901 = vmul.f32 %v857, %v857
    %v902 = vmul.f32 %v858, %v858
    %v903 = vmul.f32 %v859, %v859
    %v904 = vmul.f32 %v860, %v860
    %v905 = vmul.f32 %v861, %v861
    %v906 = vmul.f32 %v862, %v862
    %v907 = vmul.f32 %v863, %v863
    %v908 = vmul.f32 %v864, %v864
    %v909 = vmul.f32 %v865, %v865
    %v910 = vmul.f32 %v866, %v866
    %v911 = vmul.f32 %v867, %v867
    %v912 = vmul.f32 %v868, %v868
    %v913 = vmul.f32 %v869, %v869
    %v914 = vmul.f32 %v870, %v870
    %v915 = vadd.f32 %v899, %v901
    %v916 = vadd.f32 %v915, %v903
    %v917 = vadd.f32 %v916, %v905
    %v918 = vadd.f32 %v917, %v907
    %v919 = vadd.f32 %v918, %v909
    %v920 = vadd.f32 %v919, %v911
    %v921 = vadd.f32 %v920, %v913
    %v922 = vrot.slane %v921, 4
    %v923 = vadd.f32 %v921, %v922
    %v924 = vrot.slane %v923, 2
    %v925 = vadd.f32 %v923, %v924
    %v926 = vrot.slane %v925, 1
    %v927 = vadd.f32 %v925, %v926
    %v928 = vadd.f32 %v900, %v902
    %v929 = vadd.f32 %v928, %v904
    %v930 = vadd.f32 %v929, %v906
    %v931 = vadd.f32 %v930, %v908
    %v932 = vadd.f32 %v931, %v910
    %v933 = vadd.f32 %v932, %v912
    %v934 = vadd.f32 %v933, %v914
    %v935 = vrot.slane %v934, 4
    %v936 = vadd.f32 %v934, %v935
    %v937 = vrot.slane %v936, 2
    %v938 = vadd.f32 %v936, %v937
    %v939 = vrot.slane %v938, 1
    %v940 = vadd.f32 %v938, %v939
    %v941 = vadd.f32 %v927, 0.0
    %v942 = vadd.f32 %v940, 0.0
    %s943 = smul.u32 8, 2
    %s944 = smul.addr %s943, 8
    %s945 = scalar_lea.vmem [#allocation2], %s944
    %v946 = vld [vmem:[%s945] sm:$0xff]
    %v947 = vld [vmem:[%s945 + $0x8] sm:$0xff]
    %v948 = vld [vmem:[%s945 + $0x10] sm:$0xff]
    %v949 = vld [vmem:[%s945 + $0x18] sm:$0xff]
    %v950 = vld [vmem:[%s945 + $0x20] sm:$0xff]
    %v951 = vld [vmem:[%s945 + $0x28] sm:$0xff]
    %v952 = vld [vmem:[%s945 + $0x30] sm:$0xff]
    %v953 = vld [vmem:[%s945 + $0x38] sm:$0xff]
    %v954 = vld [vmem:[%s945 + $0x40] sm:$0xff]
    %v955 = vld [vmem:[%s945 + $0x48] sm:$0xff]
    %v956 = vld [vmem:[%s945 + $0x50] sm:$0xff]
    %v957 = vld [vmem:[%s945 + $0x58] sm:$0xff]
    %v958 = vld [vmem:[%s945 + $0x60] sm:$0xff]
    %v959 = vld [vmem:[%s945 + $0x68] sm:$0xff]
    %v960 = vld [vmem:[%s945 + $0x70] sm:$0xff]
    %v961 = vld [vmem:[%s945 + $0x78] sm:$0xff]
    %v962 = vadd.f32 %v946, %v948
    %v963 = vadd.f32 %v962, %v950
    %v964 = vadd.f32 %v963, %v952
    %v965 = vadd.f32 %v964, %v954
    %v966 = vadd.f32 %v965, %v956
    %v967 = vadd.f32 %v966, %v958
    %v968 = vadd.f32 %v967, %v960
    %v969 = vrot.slane %v968, 4
    %v970 = vadd.f32 %v968, %v969
    %v971 = vrot.slane %v970, 2
    %v972 = vadd.f32 %v970, %v971
    %v973 = vrot.slane %v972, 1
    %v974 = vadd.f32 %v972, %v973
    %v975 = vadd.f32 %v947, %v949
    %v976 = vadd.f32 %v975, %v951
    %v977 = vadd.f32 %v976, %v953
    %v978 = vadd.f32 %v977, %v955
    %v979 = vadd.f32 %v978, %v957
    %v980 = vadd.f32 %v979, %v959
    %v981 = vadd.f32 %v980, %v961
    %v982 = vrot.slane %v981, 4
    %v983 = vadd.f32 %v981, %v982
    %v984 = vrot.slane %v983, 2
    %v985 = vadd.f32 %v983, %v984
    %v986 = vrot.slane %v985, 1
    %v987 = vadd.f32 %v985, %v986
    %v988 = vadd.f32 %v897, %v974
    %v989 = vadd.f32 %v898, %v987
    %v990 = vmul.f32 %v946, %v946
    %v991 = vmul.f32 %v947, %v947
    %v992 = vmul.f32 %v948, %v948
    %v993 = vmul.f32 %v949, %v949
    %v994 = vmul.f32 %v950, %v950
    %v995 = vmul.f32 %v951, %v951
    %v996 = vmul.f32 %v952, %v952
    %v997 = vmul.f32 %v953, %v953
    %v998 = vmul.f32 %v954, %v954
    %v999 = vmul.f32 %v955, %v955
    %v1000 = vmul.f32 %v956, %v956
    %v1001 = vmul.f32 %v957, %v957
    %v1002 = vmul.f32 %v958, %v958
    %v1003 = vmul.f32 %v959, %v959
    %v1004 = vmul.f32 %v960, %v960
    %v1005 = vmul.f32 %v961, %v961
    %v1006 = vadd.f32 %v990, %v992
    %v1007 = vadd.f32 %v1006, %v994
    %v1008 = vadd.f32 %v1007, %v996
    %v1009 = vadd.f32 %v1008, %v998
    %v1010 = vadd.f32 %v1009, %v1000
    %v1011 = vadd.f32 %v1010, %v1002
    %v1012 = vadd.f32 %v1011, %v1004
    %v1013 = vrot.slane %v1012, 4
    %v1014 = vadd.f32 %v1012, %v1013
    %v1015 = vrot.slane %v1014, 2
    %v1016 = vadd.f32 %v1014, %v1015
    %v1017 = vrot.slane %v1016, 1
    %v1018 = vadd.f32 %v1016, %v1017
    %v1019 = vadd.f32 %v991, %v993
    %v1020 = vadd.f32 %v1019, %v995
    %v1021 = vadd.f32 %v1020, %v997
    %v1022 = vadd.f32 %v1021, %v999
    %v1023 = vadd.f32 %v1022, %v1001
    %v1024 = vadd.f32 %v1023, %v1003
    %v1025 = vadd.f32 %v1024, %v1005
    %v1026 = vrot.slane %v1025, 4
    %v1027 = vadd.f32 %v1025, %v1026
    %v1028 = vrot.slane %v1027, 2
    %v1029 = vadd.f32 %v1027, %v1028
    %v1030 = vrot.slane %v1029, 1
    %v1031 = vadd.f32 %v1029, %v1030
    %v1032 = vadd.f32 %v941, %v1018
    %v1033 = vadd.f32 %v942, %v1031
    %s1034 = smul.u32 16, 2
    %s1035 = smul.addr %s1034, 8
    %s1036 = scalar_lea.vmem [#allocation2], %s1035
    %v1037 = vld [vmem:[%s1036] sm:$0xff]
    %v1038 = vld [vmem:[%s1036 + $0x8] sm:$0xff]
    %v1039 = vld [vmem:[%s1036 + $0x10] sm:$0xff]
    %v1040 = vld [vmem:[%s1036 + $0x18] sm:$0xff]
    %v1041 = vld [vmem:[%s1036 + $0x20] sm:$0xff]
    %v1042 = vld [vmem:[%s1036 + $0x28] sm:$0xff]
    %v1043 = vld [vmem:[%s1036 + $0x30] sm:$0xff]
    %v1044 = vld [vmem:[%s1036 + $0x38] sm:$0xff]
    %v1045 = vld [vmem:[%s1036 + $0x40] sm:$0xff]
    %v1046 = vld [vmem:[%s1036 + $0x48] sm:$0xff]
    %v1047 = vld [vmem:[%s1036 + $0x50] sm:$0xff]
    %v1048 = vld [vmem:[%s1036 + $0x58] sm:$0xff]
    %v1049 = vld [vmem:[%s1036 + $0x60] sm:$0xff]
    %v1050 = vld [vmem:[%s1036 + $0x68] sm:$0xff]
    %v1051 = vld [vmem:[%s1036 + $0x70] sm:$0xff]
    %v1052 = vld [vmem:[%s1036 + $0x78] sm:$0xff]
    %v1053 = vadd.f32 %v1037, %v1039
    %v1054 = vadd.f32 %v1053, %v1041
    %v1055 = vadd.f32 %v1054, %v1043
    %v1056 = vadd.f32 %v1055, %v1045
    %v1057 = vadd.f32 %v1056, %v1047
    %v1058 = vadd.f32 %v1057, %v1049
    %v1059 = vadd.f32 %v1058, %v1051
    %v1060 = vrot.slane %v1059, 4
    %v1061 = vadd.f32 %v1059, %v1060
    %v1062 = vrot.slane %v1061, 2
    %v1063 = vadd.f32 %v1061, %v1062
    %v1064 = vrot.slane %v1063, 1
    %v1065 = vadd.f32 %v1063, %v1064
    %v1066 = vadd.f32 %v1038, %v1040
    %v1067 = vadd.f32 %v1066, %v1042
    %v1068 = vadd.f32 %v1067, %v1044
    %v1069 = vadd.f32 %v1068, %v1046
    %v1070 = vadd.f32 %v1069, %v1048
    %v1071 = vadd.f32 %v1070, %v1050
    %v1072 = vadd.f32 %v1071, %v1052
    %v1073 = vrot.slane %v1072, 4
    %v1074 = vadd.f32 %v1072, %v1073
    %v1075 = vrot.slane %v1074, 2
    %v1076 = vadd.f32 %v1074, %v1075
    %v1077 = vrot.slane %v1076, 1
    %v1078 = vadd.f32 %v1076, %v1077
    %v1079 = vadd.f32 %v988, %v1065
    %v1080 = vadd.f32 %v989, %v1078
    %v1081 = vmul.f32 %v1037, %v1037
    %v1082 = vmul.f32 %v1038, %v1038
    %v1083 = vmul.f32 %v1039, %v1039
    %v1084 = vmul.f32 %v1040, %v1040
    %v1085 = vmul.f32 %v1041, %v1041
    %v1086 = vmul.f32 %v1042, %v1042
    %v1087 = vmul.f32 %v1043, %v1043
    %v1088 = vmul.f32 %v1044, %v1044
    %v1089 = vmul.f32 %v1045, %v1045
    %v1090 = vmul.f32 %v1046, %v1046
    %v1091 = vmul.f32 %v1047, %v1047
    %v1092 = vmul.f32 %v1048, %v1048
    %v1093 = vmul.f32 %v1049, %v1049
    %v1094 = vmul.f32 %v1050, %v1050
    %v1095 = vmul.f32 %v1051, %v1051
    %v1096 = vmul.f32 %v1052, %v1052
    %v1097 = vadd.f32 %v1081, %v1083
    %v1098 = vadd.f32 %v1097, %v1085
    %v1099 = vadd.f32 %v1098, %v1087
    %v1100 = vadd.f32 %v1099, %v1089
    %v1101 = vadd.f32 %v1100, %v1091
    %v1102 = vadd.f32 %v1101, %v1093
    %v1103 = vadd.f32 %v1102, %v1095
    %v1104 = vrot.slane %v1103, 4
    %v1105 = vadd.f32 %v1103, %v1104
    %v1106 = vrot.slane %v1105, 2
    %v1107 = vadd.f32 %v1105, %v1106
    %v1108 = vrot.slane %v1107, 1
    %v1109 = vadd.f32 %v1107, %v1108
    %v1110 = vadd.f32 %v1082, %v1084
    %v1111 = vadd.f32 %v1110, %v1086
    %v1112 = vadd.f32 %v1111, %v1088
    %v1113 = vadd.f32 %v1112, %v1090
    %v1114 = vadd.f32 %v1113, %v1092
    %v1115 = vadd.f32 %v1114, %v1094
    %v1116 = vadd.f32 %v1115, %v1096
    %v1117 = vrot.slane %v1116, 4
    %v1118 = vadd.f32 %v1116, %v1117
    %v1119 = vrot.slane %v1118, 2
    %v1120 = vadd.f32 %v1118, %v1119
    %v1121 = vrot.slane %v1120, 1
    %v1122 = vadd.f32 %v1120, %v1121
    %v1123 = vadd.f32 %v1032, %v1109
    %v1124 = vadd.f32 %v1033, %v1122
    %s1125 = smul.u32 24, 2
    %s1126 = smul.addr %s1125, 8
    %s1127 = scalar_lea.vmem [#allocation2], %s1126
    %v1128 = vld [vmem:[%s1127] sm:$0xff]
    %v1129 = vld [vmem:[%s1127 + $0x8] sm:$0xff]
    %v1130 = vld [vmem:[%s1127 + $0x10] sm:$0xff]
    %v1131 = vld [vmem:[%s1127 + $0x18] sm:$0xff]
    %v1132 = vld [vmem:[%s1127 + $0x20] sm:$0xff]
    %v1133 = vld [vmem:[%s1127 + $0x28] sm:$0xff]
    %v1134 = vld [vmem:[%s1127 + $0x30] sm:$0xff]
    %v1135 = vld [vmem:[%s1127 + $0x38] sm:$0xff]
    %v1136 = vld [vmem:[%s1127 + $0x40] sm:$0xff]
    %v1137 = vld [vmem:[%s1127 + $0x48] sm:$0xff]
    %v1138 = vld [vmem:[%s1127 + $0x50] sm:$0xff]
    %v1139 = vld [vmem:[%s1127 + $0x58] sm:$0xff]
    %v1140 = vld [vmem:[%s1127 + $0x60] sm:$0xff]
    %v1141 = vld [vmem:[%s1127 + $0x68] sm:$0xff]
    %v1142 = vld [vmem:[%s1127 + $0x70] sm:$0xff]
    %v1143 = vld [vmem:[%s1127 + $0x78] sm:$0xff]
    %v1144 = vadd.f32 %v1128, %v1130
    %v1145 = vadd.f32 %v1144, %v1132
    %v1146 = vadd.f32 %v1145, %v1134
    %v1147 = vadd.f32 %v1146, %v1136
    %v1148 = vadd.f32 %v1147, %v1138
    %v1149 = vadd.f32 %v1148, %v1140
    %v1150 = vadd.f32 %v1149, %v1142
    %v1151 = vrot.slane %v1150, 4
    %v1152 = vadd.f32 %v1150, %v1151
    %v1153 = vrot.slane %v1152, 2
    %v1154 = vadd.f32 %v1152, %v1153
    %v1155 = vrot.slane %v1154, 1
    %v1156 = vadd.f32 %v1154, %v1155
    %v1157 = vadd.f32 %v1129, %v1131
    %v1158 = vadd.f32 %v1157, %v1133
    %v1159 = vadd.f32 %v1158, %v1135
    %v1160 = vadd.f32 %v1159, %v1137
    %v1161 = vadd.f32 %v1160, %v1139
    %v1162 = vadd.f32 %v1161, %v1141
    %v1163 = vadd.f32 %v1162, %v1143
    %v1164 = vrot.slane %v1163, 4
    %v1165 = vadd.f32 %v1163, %v1164
    %v1166 = vrot.slane %v1165, 2
    %v1167 = vadd.f32 %v1165, %v1166
    %v1168 = vrot.slane %v1167, 1
    %v1169 = vadd.f32 %v1167, %v1168
    %v1170 = vadd.f32 %v1079, %v1156
    %v1171 = vadd.f32 %v1080, %v1169
    %v1172 = vmul.f32 %v1128, %v1128
    %v1173 = vmul.f32 %v1129, %v1129
    %v1174 = vmul.f32 %v1130, %v1130
    %v1175 = vmul.f32 %v1131, %v1131
    %v1176 = vmul.f32 %v1132, %v1132
    %v1177 = vmul.f32 %v1133, %v1133
    %v1178 = vmul.f32 %v1134, %v1134
    %v1179 = vmul.f32 %v1135, %v1135
    %v1180 = vmul.f32 %v1136, %v1136
    %v1181 = vmul.f32 %v1137, %v1137
    %v1182 = vmul.f32 %v1138, %v1138
    %v1183 = vmul.f32 %v1139, %v1139
    %v1184 = vmul.f32 %v1140, %v1140
    %v1185 = vmul.f32 %v1141, %v1141
    %v1186 = vmul.f32 %v1142, %v1142
    %v1187 = vmul.f32 %v1143, %v1143
    %v1188 = vadd.f32 %v1172, %v1174
    %v1189 = vadd.f32 %v1188, %v1176
    %v1190 = vadd.f32 %v1189, %v1178
    %v1191 = vadd.f32 %v1190, %v1180
    %v1192 = vadd.f32 %v1191, %v1182
    %v1193 = vadd.f32 %v1192, %v1184
    %v1194 = vadd.f32 %v1193, %v1186
    %v1195 = vrot.slane %v1194, 4
    %v1196 = vadd.f32 %v1194, %v1195
    %v1197 = vrot.slane %v1196, 2
    %v1198 = vadd.f32 %v1196, %v1197
    %v1199 = vrot.slane %v1198, 1
    %v1200 = vadd.f32 %v1198, %v1199
    %v1201 = vadd.f32 %v1173, %v1175
    %v1202 = vadd.f32 %v1201, %v1177
    %v1203 = vadd.f32 %v1202, %v1179
    %v1204 = vadd.f32 %v1203, %v1181
    %v1205 = vadd.f32 %v1204, %v1183
    %v1206 = vadd.f32 %v1205, %v1185
    %v1207 = vadd.f32 %v1206, %v1187
    %v1208 = vrot.slane %v1207, 4
    %v1209 = vadd.f32 %v1207, %v1208
    %v1210 = vrot.slane %v1209, 2
    %v1211 = vadd.f32 %v1209, %v1210
    %v1212 = vrot.slane %v1211, 1
    %v1213 = vadd.f32 %v1211, %v1212
    %v1214 = vadd.f32 %v1123, %v1200
    %v1215 = vadd.f32 %v1124, %v1213
    %s1216 = smul.u32 32, 2
    %s1217 = smul.addr %s1216, 8
    %s1218 = scalar_lea.vmem [#allocation2], %s1217
    %v1219 = vld [vmem:[%s1218] sm:$0xff]
    %v1220 = vld [vmem:[%s1218 + $0x8] sm:$0xff]
    %v1221 = vld [vmem:[%s1218 + $0x10] sm:$0xff]
    %v1222 = vld [vmem:[%s1218 + $0x18] sm:$0xff]
    %v1223 = vld [vmem:[%s1218 + $0x20] sm:$0xff]
    %v1224 = vld [vmem:[%s1218 + $0x28] sm:$0xff]
    %v1225 = vld [vmem:[%s1218 + $0x30] sm:$0xff]
    %v1226 = vld [vmem:[%s1218 + $0x38] sm:$0xff]
    %v1227 = vld [vmem:[%s1218 + $0x40] sm:$0xff]
    %v1228 = vld [vmem:[%s1218 + $0x48] sm:$0xff]
    %v1229 = vld [vmem:[%s1218 + $0x50] sm:$0xff]
    %v1230 = vld [vmem:[%s1218 + $0x58] sm:$0xff]
    %v1231 = vld [vmem:[%s1218 + $0x60] sm:$0xff]
    %v1232 = vld [vmem:[%s1218 + $0x68] sm:$0xff]
    %v1233 = vld [vmem:[%s1218 + $0x70] sm:$0xff]
    %v1234 = vld [vmem:[%s1218 + $0x78] sm:$0xff]
    %v1235 = vadd.f32 %v1219, %v1221
    %v1236 = vadd.f32 %v1235, %v1223
    %v1237 = vadd.f32 %v1236, %v1225
    %v1238 = vadd.f32 %v1237, %v1227
    %v1239 = vadd.f32 %v1238, %v1229
    %v1240 = vadd.f32 %v1239, %v1231
    %v1241 = vadd.f32 %v1240, %v1233
    %v1242 = vrot.slane %v1241, 4
    %v1243 = vadd.f32 %v1241, %v1242
    %v1244 = vrot.slane %v1243, 2
    %v1245 = vadd.f32 %v1243, %v1244
    %v1246 = vrot.slane %v1245, 1
    %v1247 = vadd.f32 %v1245, %v1246
    %v1248 = vadd.f32 %v1220, %v1222
    %v1249 = vadd.f32 %v1248, %v1224
    %v1250 = vadd.f32 %v1249, %v1226
    %v1251 = vadd.f32 %v1250, %v1228
    %v1252 = vadd.f32 %v1251, %v1230
    %v1253 = vadd.f32 %v1252, %v1232
    %v1254 = vadd.f32 %v1253, %v1234
    %v1255 = vrot.slane %v1254, 4
    %v1256 = vadd.f32 %v1254, %v1255
    %v1257 = vrot.slane %v1256, 2
    %v1258 = vadd.f32 %v1256, %v1257
    %v1259 = vrot.slane %v1258, 1
    %v1260 = vadd.f32 %v1258, %v1259
    %v1261 = vadd.f32 %v1170, %v1247
    %v1262 = vadd.f32 %v1171, %v1260
    %v1263 = vmul.f32 %v1219, %v1219
    %v1264 = vmul.f32 %v1220, %v1220
    %v1265 = vmul.f32 %v1221, %v1221
    %v1266 = vmul.f32 %v1222, %v1222
    %v1267 = vmul.f32 %v1223, %v1223
    %v1268 = vmul.f32 %v1224, %v1224
    %v1269 = vmul.f32 %v1225, %v1225
    %v1270 = vmul.f32 %v1226, %v1226
    %v1271 = vmul.f32 %v1227, %v1227
    %v1272 = vmul.f32 %v1228, %v1228
    %v1273 = vmul.f32 %v1229, %v1229
    %v1274 = vmul.f32 %v1230, %v1230
    %v1275 = vmul.f32 %v1231, %v1231
    %v1276 = vmul.f32 %v1232, %v1232
    %v1277 = vmul.f32 %v1233, %v1233
    %v1278 = vmul.f32 %v1234, %v1234
    %v1279 = vadd.f32 %v1263, %v1265
    %v1280 = vadd.f32 %v1279, %v1267
    %v1281 = vadd.f32 %v1280, %v1269
    %v1282 = vadd.f32 %v1281, %v1271
    %v1283 = vadd.f32 %v1282, %v1273
    %v1284 = vadd.f32 %v1283, %v1275
    %v1285 = vadd.f32 %v1284, %v1277
    %v1286 = vrot.slane %v1285, 4
    %v1287 = vadd.f32 %v1285, %v1286
    %v1288 = vrot.slane %v1287, 2
    %v1289 = vadd.f32 %v1287, %v1288
    %v1290 = vrot.slane %v1289, 1
    %v1291 = vadd.f32 %v1289, %v1290
    %v1292 = vadd.f32 %v1264, %v1266
    %v1293 = vadd.f32 %v1292, %v1268
    %v1294 = vadd.f32 %v1293, %v1270
    %v1295 = vadd.f32 %v1294, %v1272
    %v1296 = vadd.f32 %v1295, %v1274
    %v1297 = vadd.f32 %v1296, %v1276
    %v1298 = vadd.f32 %v1297, %v1278
    %v1299 = vrot.slane %v1298, 4
    %v1300 = vadd.f32 %v1298, %v1299
    %v1301 = vrot.slane %v1300, 2
    %v1302 = vadd.f32 %v1300, %v1301
    %v1303 = vrot.slane %v1302, 1
    %v1304 = vadd.f32 %v1302, %v1303
    %v1305 = vadd.f32 %v1214, %v1291
    %v1306 = vadd.f32 %v1215, %v1304
    %s1307 = smul.u32 40, 2
    %s1308 = smul.addr %s1307, 8
    %s1309 = scalar_lea.vmem [#allocation2], %s1308
    %v1310 = vld [vmem:[%s1309] sm:$0xff]
    %v1311 = vld [vmem:[%s1309 + $0x8] sm:$0xff]
    %v1312 = vld [vmem:[%s1309 + $0x10] sm:$0xff]
    %v1313 = vld [vmem:[%s1309 + $0x18] sm:$0xff]
    %v1314 = vld [vmem:[%s1309 + $0x20] sm:$0xff]
    %v1315 = vld [vmem:[%s1309 + $0x28] sm:$0xff]
    %v1316 = vld [vmem:[%s1309 + $0x30] sm:$0xff]
    %v1317 = vld [vmem:[%s1309 + $0x38] sm:$0xff]
    %v1318 = vld [vmem:[%s1309 + $0x40] sm:$0xff]
    %v1319 = vld [vmem:[%s1309 + $0x48] sm:$0xff]
    %v1320 = vld [vmem:[%s1309 + $0x50] sm:$0xff]
    %v1321 = vld [vmem:[%s1309 + $0x58] sm:$0xff]
    %v1322 = vld [vmem:[%s1309 + $0x60] sm:$0xff]
    %v1323 = vld [vmem:[%s1309 + $0x68] sm:$0xff]
    %v1324 = vld [vmem:[%s1309 + $0x70] sm:$0xff]
    %v1325 = vld [vmem:[%s1309 + $0x78] sm:$0xff]
    %v1326 = vadd.f32 %v1310, %v1312
    %v1327 = vadd.f32 %v1326, %v1314
    %v1328 = vadd.f32 %v1327, %v1316
    %v1329 = vadd.f32 %v1328, %v1318
    %v1330 = vadd.f32 %v1329, %v1320
    %v1331 = vadd.f32 %v1330, %v1322
    %v1332 = vadd.f32 %v1331, %v1324
    %v1333 = vrot.slane %v1332, 4
    %v1334 = vadd.f32 %v1332, %v1333
    %v1335 = vrot.slane %v1334, 2
    %v1336 = vadd.f32 %v1334, %v1335
    %v1337 = vrot.slane %v1336, 1
    %v1338 = vadd.f32 %v1336, %v1337
    %v1339 = vadd.f32 %v1311, %v1313
    %v1340 = vadd.f32 %v1339, %v1315
    %v1341 = vadd.f32 %v1340, %v1317
    %v1342 = vadd.f32 %v1341, %v1319
    %v1343 = vadd.f32 %v1342, %v1321
    %v1344 = vadd.f32 %v1343, %v1323
    %v1345 = vadd.f32 %v1344, %v1325
    %v1346 = vrot.slane %v1345, 4
    %v1347 = vadd.f32 %v1345, %v1346
    %v1348 = vrot.slane %v1347, 2
    %v1349 = vadd.f32 %v1347, %v1348
    %v1350 = vrot.slane %v1349, 1
    %v1351 = vadd.f32 %v1349, %v1350
    %v1352 = vadd.f32 %v1261, %v1338
    %v1353 = vadd.f32 %v1262, %v1351
    %v1354 = vmul.f32 %v1310, %v1310
    %v1355 = vmul.f32 %v1311, %v1311
    %v1356 = vmul.f32 %v1312, %v1312
    %v1357 = vmul.f32 %v1313, %v1313
    %v1358 = vmul.f32 %v1314, %v1314
    %v1359 = vmul.f32 %v1315, %v1315
    %v1360 = vmul.f32 %v1316, %v1316
    %v1361 = vmul.f32 %v1317, %v1317
    %v1362 = vmul.f32 %v1318, %v1318
    %v1363 = vmul.f32 %v1319, %v1319
    %v1364 = vmul.f32 %v1320, %v1320
    %v1365 = vmul.f32 %v1321, %v1321
    %v1366 = vmul.f32 %v1322, %v1322
    %v1367 = vmul.f32 %v1323, %v1323
    %v1368 = vmul.f32 %v1324, %v1324
    %v1369 = vmul.f32 %v1325, %v1325
    %v1370 = vadd.f32 %v1354, %v1356
    %v1371 = vadd.f32 %v1370, %v1358
    %v1372 = vadd.f32 %v1371, %v1360
    %v1373 = vadd.f32 %v1372, %v1362
    %v1374 = vadd.f32 %v1373, %v1364
    %v1375 = vadd.f32 %v1374, %v1366
    %v1376 = vadd.f32 %v1375, %v1368
    %v1377 = vrot.slane %v1376, 4
    %v1378 = vadd.f32 %v1376, %v1377
    %v1379 = vrot.slane %v1378, 2
    %v1380 = vadd.f32 %v1378, %v1379
    %v1381 = vrot.slane %v1380, 1
    %v1382 = vadd.f32 %v1380, %v1381
    %v1383 = vadd.f32 %v1355, %v1357
    %v1384 = vadd.f32 %v1383, %v1359
    %v1385 = vadd.f32 %v1384, %v1361
    %v1386 = vadd.f32 %v1385, %v1363
    %v1387 = vadd.f32 %v1386, %v1365
    %v1388 = vadd.f32 %v1387, %v1367
    %v1389 = vadd.f32 %v1388, %v1369
    %v1390 = vrot.slane %v1389, 4
    %v1391 = vadd.f32 %v1389, %v1390
    %v1392 = vrot.slane %v1391, 2
    %v1393 = vadd.f32 %v1391, %v1392
    %v1394 = vrot.slane %v1393, 1
    %v1395 = vadd.f32 %v1393, %v1394
    %v1396 = vadd.f32 %v1305, %v1382
    %v1397 = vadd.f32 %v1306, %v1395
    %s1398 = smul.u32 48, 2
    %s1399 = smul.addr %s1398, 8
    %s1400 = scalar_lea.vmem [#allocation2], %s1399
    %v1401 = vld [vmem:[%s1400] sm:$0xff]
    %v1402 = vld [vmem:[%s1400 + $0x8] sm:$0xff]
    %v1403 = vld [vmem:[%s1400 + $0x10] sm:$0xff]
    %v1404 = vld [vmem:[%s1400 + $0x18] sm:$0xff]
    %v1405 = vld [vmem:[%s1400 + $0x20] sm:$0xff]
    %v1406 = vld [vmem:[%s1400 + $0x28] sm:$0xff]
    %v1407 = vld [vmem:[%s1400 + $0x30] sm:$0xff]
    %v1408 = vld [vmem:[%s1400 + $0x38] sm:$0xff]
    %v1409 = vld [vmem:[%s1400 + $0x40] sm:$0xff]
    %v1410 = vld [vmem:[%s1400 + $0x48] sm:$0xff]
    %v1411 = vld [vmem:[%s1400 + $0x50] sm:$0xff]
    %v1412 = vld [vmem:[%s1400 + $0x58] sm:$0xff]
    %v1413 = vld [vmem:[%s1400 + $0x60] sm:$0xff]
    %v1414 = vld [vmem:[%s1400 + $0x68] sm:$0xff]
    %v1415 = vld [vmem:[%s1400 + $0x70] sm:$0xff]
    %v1416 = vld [vmem:[%s1400 + $0x78] sm:$0xff]
    %v1417 = vadd.f32 %v1401, %v1403
    %v1418 = vadd.f32 %v1417, %v1405
    %v1419 = vadd.f32 %v1418, %v1407
    %v1420 = vadd.f32 %v1419, %v1409
    %v1421 = vadd.f32 %v1420, %v1411
    %v1422 = vadd.f32 %v1421, %v1413
    %v1423 = vadd.f32 %v1422, %v1415
    %v1424 = vrot.slane %v1423, 4
    %v1425 = vadd.f32 %v1423, %v1424
    %v1426 = vrot.slane %v1425, 2
    %v1427 = vadd.f32 %v1425, %v1426
    %v1428 = vrot.slane %v1427, 1
    %v1429 = vadd.f32 %v1427, %v1428
    %v1430 = vadd.f32 %v1402, %v1404
    %v1431 = vadd.f32 %v1430, %v1406
    %v1432 = vadd.f32 %v1431, %v1408
    %v1433 = vadd.f32 %v1432, %v1410
    %v1434 = vadd.f32 %v1433, %v1412
    %v1435 = vadd.f32 %v1434, %v1414
    %v1436 = vadd.f32 %v1435, %v1416
    %v1437 = vrot.slane %v1436, 4
    %v1438 = vadd.f32 %v1436, %v1437
    %v1439 = vrot.slane %v1438, 2
    %v1440 = vadd.f32 %v1438, %v1439
    %v1441 = vrot.slane %v1440, 1
    %v1442 = vadd.f32 %v1440, %v1441
    %v1443 = vadd.f32 %v1352, %v1429
    %v1444 = vadd.f32 %v1353, %v1442
    %v1445 = vmul.f32 %v1401, %v1401
    %v1446 = vmul.f32 %v1402, %v1402
    %v1447 = vmul.f32 %v1403, %v1403
    %v1448 = vmul.f32 %v1404, %v1404
    %v1449 = vmul.f32 %v1405, %v1405
    %v1450 = vmul.f32 %v1406, %v1406
    %v1451 = vmul.f32 %v1407, %v1407
    %v1452 = vmul.f32 %v1408, %v1408
    %v1453 = vmul.f32 %v1409, %v1409
    %v1454 = vmul.f32 %v1410, %v1410
    %v1455 = vmul.f32 %v1411, %v1411
    %v1456 = vmul.f32 %v1412, %v1412
    %v1457 = vmul.f32 %v1413, %v1413
    %v1458 = vmul.f32 %v1414, %v1414
    %v1459 = vmul.f32 %v1415, %v1415
    %v1460 = vmul.f32 %v1416, %v1416
    %v1461 = vadd.f32 %v1445, %v1447
    %v1462 = vadd.f32 %v1461, %v1449
    %v1463 = vadd.f32 %v1462, %v1451
    %v1464 = vadd.f32 %v1463, %v1453
    %v1465 = vadd.f32 %v1464, %v1455
    %v1466 = vadd.f32 %v1465, %v1457
    %v1467 = vadd.f32 %v1466, %v1459
    %v1468 = vrot.slane %v1467, 4
    %v1469 = vadd.f32 %v1467, %v1468
    %v1470 = vrot.slane %v1469, 2
    %v1471 = vadd.f32 %v1469, %v1470
    %v1472 = vrot.slane %v1471, 1
    %v1473 = vadd.f32 %v1471, %v1472
    %v1474 = vadd.f32 %v1446, %v1448
    %v1475 = vadd.f32 %v1474, %v1450
    %v1476 = vadd.f32 %v1475, %v1452
    %v1477 = vadd.f32 %v1476, %v1454
    %v1478 = vadd.f32 %v1477, %v1456
    %v1479 = vadd.f32 %v1478, %v1458
    %v1480 = vadd.f32 %v1479, %v1460
    %v1481 = vrot.slane %v1480, 4
    %v1482 = vadd.f32 %v1480, %v1481
    %v1483 = vrot.slane %v1482, 2
    %v1484 = vadd.f32 %v1482, %v1483
    %v1485 = vrot.slane %v1484, 1
    %v1486 = vadd.f32 %v1484, %v1485
    %v1487 = vadd.f32 %v1396, %v1473
    %v1488 = vadd.f32 %v1397, %v1486
    %s1489 = smul.u32 56, 2
    %s1490 = smul.addr %s1489, 8
    %s1491 = scalar_lea.vmem [#allocation2], %s1490
    %v1492 = vld [vmem:[%s1491] sm:$0xff]
    %v1493 = vld [vmem:[%s1491 + $0x8] sm:$0xff]
    %v1494 = vld [vmem:[%s1491 + $0x10] sm:$0xff]
    %v1495 = vld [vmem:[%s1491 + $0x18] sm:$0xff]
    %v1496 = vld [vmem:[%s1491 + $0x20] sm:$0xff]
    %v1497 = vld [vmem:[%s1491 + $0x28] sm:$0xff]
    %v1498 = vld [vmem:[%s1491 + $0x30] sm:$0xff]
    %v1499 = vld [vmem:[%s1491 + $0x38] sm:$0xff]
    %v1500 = vld [vmem:[%s1491 + $0x40] sm:$0xff]
    %v1501 = vld [vmem:[%s1491 + $0x48] sm:$0xff]
    %v1502 = vld [vmem:[%s1491 + $0x50] sm:$0xff]
    %v1503 = vld [vmem:[%s1491 + $0x58] sm:$0xff]
    %v1504 = vld [vmem:[%s1491 + $0x60] sm:$0xff]
    %v1505 = vld [vmem:[%s1491 + $0x68] sm:$0xff]
    %v1506 = vld [vmem:[%s1491 + $0x70] sm:$0xff]
    %v1507 = vld [vmem:[%s1491 + $0x78] sm:$0xff]
    %v1508 = vadd.f32 %v1492, %v1494
    %v1509 = vadd.f32 %v1508, %v1496
    %v1510 = vadd.f32 %v1509, %v1498
    %v1511 = vadd.f32 %v1510, %v1500
    %v1512 = vadd.f32 %v1511, %v1502
    %v1513 = vadd.f32 %v1512, %v1504
    %v1514 = vadd.f32 %v1513, %v1506
    %v1515 = vrot.slane %v1514, 4
    %v1516 = vadd.f32 %v1514, %v1515
    %v1517 = vrot.slane %v1516, 2
    %v1518 = vadd.f32 %v1516, %v1517
    %v1519 = vrot.slane %v1518, 1
    %v1520 = vadd.f32 %v1518, %v1519
    %v1521 = vadd.f32 %v1493, %v1495
    %v1522 = vadd.f32 %v1521, %v1497
    %v1523 = vadd.f32 %v1522, %v1499
    %v1524 = vadd.f32 %v1523, %v1501
    %v1525 = vadd.f32 %v1524, %v1503
    %v1526 = vadd.f32 %v1525, %v1505
    %v1527 = vadd.f32 %v1526, %v1507
    %v1528 = vrot.slane %v1527, 4
    %v1529 = vadd.f32 %v1527, %v1528
    %v1530 = vrot.slane %v1529, 2
    %v1531 = vadd.f32 %v1529, %v1530
    %v1532 = vrot.slane %v1531, 1
    %v1533 = vadd.f32 %v1531, %v1532
    %v1534 = vadd.f32 %v1443, %v1520
    %v1535 = vadd.f32 %v1444, %v1533
    %v1536 = vmul.f32 %v1492, %v1492
    %v1537 = vmul.f32 %v1493, %v1493
    %v1538 = vmul.f32 %v1494, %v1494
    %v1539 = vmul.f32 %v1495, %v1495
    %v1540 = vmul.f32 %v1496, %v1496
    %v1541 = vmul.f32 %v1497, %v1497
    %v1542 = vmul.f32 %v1498, %v1498
    %v1543 = vmul.f32 %v1499, %v1499
    %v1544 = vmul.f32 %v1500, %v1500
    %v1545 = vmul.f32 %v1501, %v1501
    %v1546 = vmul.f32 %v1502, %v1502
    %v1547 = vmul.f32 %v1503, %v1503
    %v1548 = vmul.f32 %v1504, %v1504
    %v1549 = vmul.f32 %v1505, %v1505
    %v1550 = vmul.f32 %v1506, %v1506
    %v1551 = vmul.f32 %v1507, %v1507
    %v1552 = vadd.f32 %v1536, %v1538
    %v1553 = vadd.f32 %v1552, %v1540
    %v1554 = vadd.f32 %v1553, %v1542
    %v1555 = vadd.f32 %v1554, %v1544
    %v1556 = vadd.f32 %v1555, %v1546
    %v1557 = vadd.f32 %v1556, %v1548
    %v1558 = vadd.f32 %v1557, %v1550
    %v1559 = vrot.slane %v1558, 4
    %v1560 = vadd.f32 %v1558, %v1559
    %v1561 = vrot.slane %v1560, 2
    %v1562 = vadd.f32 %v1560, %v1561
    %v1563 = vrot.slane %v1562, 1
    %v1564 = vadd.f32 %v1562, %v1563
    %v1565 = vadd.f32 %v1537, %v1539
    %v1566 = vadd.f32 %v1565, %v1541
    %v1567 = vadd.f32 %v1566, %v1543
    %v1568 = vadd.f32 %v1567, %v1545
    %v1569 = vadd.f32 %v1568, %v1547
    %v1570 = vadd.f32 %v1569, %v1549
    %v1571 = vadd.f32 %v1570, %v1551
    %v1572 = vrot.slane %v1571, 4
    %v1573 = vadd.f32 %v1571, %v1572
    %v1574 = vrot.slane %v1573, 2
    %v1575 = vadd.f32 %v1573, %v1574
    %v1576 = vrot.slane %v1575, 1
    %v1577 = vadd.f32 %v1575, %v1576
    %v1578 = vadd.f32 %v1487, %v1564
    %v1579 = vadd.f32 %v1488, %v1577
    %v1580 = vmul.f32 %v1534, 0.001953125
    %v1581 = vmul.f32 %v1535, 0.001953125
    %v1582 = vmul.f32 %v1578, 0.001953125
    %v1583 = vmul.f32 %v1579, 0.001953125
    %v1584 = vmul.f32 %v1580, %v1580
    %v1585 = vmul.f32 %v1581, %v1581
    %v1586 = vsub.f32 %v1582, %v1584
    %v1587 = vsub.f32 %v1583, %v1585
    %v1588 = vmax.f32 %v1586, 0.0
    %v1589 = vmax.f32 %v1587, 0.0
    %v1590 = vadd.f32 %v1588, 1e-05
    %v1591 = vadd.f32 %v1589, 1e-05
    %v1592 = vrsqrt.pop %v1590
    %v1593 = vrsqrt.pop %v1591
    %v1594 = vld [vmem:[%s2] sm:$0x3]
    %v1596 = vlaneseq
    %v1597 = vshrl.u32 %v1596, 7
    %v1598 = vsub.s32 0, %v1597
    %v1599 = vrot.slane %v1594, %v1598
    %v1600 = vlaneseq
    %v1601 = vshrl.u32 %v1600, 7
    %v1602 = vsub.s32 1, %v1601
    %v1603 = vrot.slane %v1594, %v1602
    %v1606 = vmul.f32 %v1592, %v1599
    %v1607 = vmul.f32 %v1593, %v1603
    %v1608 = vld [vmem:[%s3] sm:$0x3]
    %v1609 = vmul.f32 %v1580, %v1606
    %v1610 = vmul.f32 %v1581, %v1607
    %v1613 = vcombine.low %v1609, %v1610
    %v1615 = vunpack.c.l.s4 1966171168
    %v1616 = vunpack.c.0.s8 %v1615
    %v1617 = vlaneseq
    %v1618 = vshrl.u32 %v1617, 7
    %v1619 = vsub.s32 %v1616, %v1618
    %v1620 = vrot.slane %v1613, %v1619
    %v1622 = vunpack.c.l.s4 1966171168
    %v1623 = vunpack.c.0.s8 %v1622
    %v1624 = vlaneseq
    %v1625 = vshrl.u32 %v1624, 7
    %v1626 = vsub.s32 %v1623, %v1625
    %v1627 = vrot.slane %v1620, %v1626
    %v1629 = vsub.f32 %v1608, %v1627
    %v1630 = vlaneseq
    %v1631 = vshrl.u32 %v1630, 7
    %v1632 = vsub.s32 0, %v1631
    %v1633 = vrot.slane %v1606, %v1632
    %v1634 = vlaneseq
    %v1635 = vshrl.u32 %v1634, 7
    %v1636 = vsub.s32 0, %v1635
    %v1637 = vrot.slane %v1607, %v1636
    %v1638 = vmul.f32 %v855, %v1633
    %v1639 = vmul.f32 %v856, %v1637
    %v1640 = vmul.f32 %v857, %v1633
    %v1641 = vmul.f32 %v858, %v1637
    %v1642 = vmul.f32 %v859, %v1633
    %v1643 = vmul.f32 %v860, %v1637
    %v1644 = vmul.f32 %v861, %v1633
    %v1645 = vmul.f32 %v862, %v1637
    %v1646 = vmul.f32 %v863, %v1633
    %v1647 = vmul.f32 %v864, %v1637
    %v1648 = vmul.f32 %v865, %v1633
    %v1649 = vmul.f32 %v866, %v1637
    %v1650 = vmul.f32 %v867, %v1633
    %v1651 = vmul.f32 %v868, %v1637
    %v1652 = vmul.f32 %v869, %v1633
    %v1653 = vmul.f32 %v870, %v1637
    %v1655 = vlaneseq
    %v1656 = vshrl.u32 %v1655, 7
    %v1657 = vsub.s32 0, %v1656
    %v1658 = vrot.slane %v1629, %v1657
    %v1659 = vlaneseq
    %v1660 = vshrl.u32 %v1659, 7
    %v1661 = vsub.s32 1, %v1660
    %v1662 = vrot.slane %v1629, %v1661
    %v1665 = vadd.f32 %v1638, %v1658
    %v1666 = vadd.f32 %v1639, %v1662
    %v1667 = vadd.f32 %v1640, %v1658
    %v1668 = vadd.f32 %v1641, %v1662
    %v1669 = vadd.f32 %v1642, %v1658
    %v1670 = vadd.f32 %v1643, %v1662
    %v1671 = vadd.f32 %v1644, %v1658
    %v1672 = vadd.f32 %v1645, %v1662
    %v1673 = vadd.f32 %v1646, %v1658
    %v1674 = vadd.f32 %v1647, %v1662
    %v1675 = vadd.f32 %v1648, %v1658
    %v1676 = vadd.f32 %v1649, %v1662
    %v1677 = vadd.f32 %v1650, %v1658
    %v1678 = vadd.f32 %v1651, %v1662
    %v1679 = vadd.f32 %v1652, %v1658
    %v1680 = vadd.f32 %v1653, %v1662
    %v1681 = vmax.f32 %v1665, 0.0
    %v1682 = vmax.f32 %v1666, 0.0
    %v1683 = vmax.f32 %v1667, 0.0
    %v1684 = vmax.f32 %v1668, 0.0
    %v1685 = vmax.f32 %v1669, 0.0
    %v1686 = vmax.f32 %v1670, 0.0
    %v1687 = vmax.f32 %v1671, 0.0
    %v1688 = vmax.f32 %v1672, 0.0
    %v1689 = vmax.f32 %v1673, 0.0
    %v1690 = vmax.f32 %v1674, 0.0
    %v1691 = vmax.f32 %v1675, 0.0
    %v1692 = vmax.f32 %v1676, 0.0
    %v1693 = vmax.f32 %v1677, 0.0
    %v1694 = vmax.f32 %v1678, 0.0
    %v1695 = vmax.f32 %v1679, 0.0
    %v1696 = vmax.f32 %v1680, 0.0
    %s1697 = smul.addr %s852, 8
    %s1698 = scalar_lea.vmem [#allocation3], %s1697
    %1699 = vst [vmem:[%s1698] sm:$0xff] %v1681
    %1700 = vst [vmem:[%s1698 + $0x8] sm:$0xff] %v1682
    %1701 = vst [vmem:[%s1698 + $0x10] sm:$0xff] %v1683
    %1702 = vst [vmem:[%s1698 + $0x18] sm:$0xff] %v1684
    %1703 = vst [vmem:[%s1698 + $0x20] sm:$0xff] %v1685
    %1704 = vst [vmem:[%s1698 + $0x28] sm:$0xff] %v1686
    %1705 = vst [vmem:[%s1698 + $0x30] sm:$0xff] %v1687
    %1706 = vst [vmem:[%s1698 + $0x38] sm:$0xff] %v1688
    %1707 = vst [vmem:[%s1698 + $0x40] sm:$0xff] %v1689
    %1708 = vst [vmem:[%s1698 + $0x48] sm:$0xff] %v1690
    %1709 = vst [vmem:[%s1698 + $0x50] sm:$0xff] %v1691
    %1710 = vst [vmem:[%s1698 + $0x58] sm:$0xff] %v1692
    %1711 = vst [vmem:[%s1698 + $0x60] sm:$0xff] %v1693
    %1712 = vst [vmem:[%s1698 + $0x68] sm:$0xff] %v1694
    %1713 = vst [vmem:[%s1698 + $0x70] sm:$0xff] %v1695
    %1714 = vst [vmem:[%s1698 + $0x78] sm:$0xff] %v1696
    %v1715 = vld [vmem:[%s945] sm:$0xff]
    %v1716 = vld [vmem:[%s945 + $0x8] sm:$0xff]
    %v1717 = vld [vmem:[%s945 + $0x10] sm:$0xff]
    %v1718 = vld [vmem:[%s945 + $0x18] sm:$0xff]
    %v1719 = vld [vmem:[%s945 + $0x20] sm:$0xff]
    %v1720 = vld [vmem:[%s945 + $0x28] sm:$0xff]
    %v1721 = vld [vmem:[%s945 + $0x30] sm:$0xff]
    %v1722 = vld [vmem:[%s945 + $0x38] sm:$0xff]
    %v1723 = vld [vmem:[%s945 + $0x40] sm:$0xff]
    %v1724 = vld [vmem:[%s945 + $0x48] sm:$0xff]
    %v1725 = vld [vmem:[%s945 + $0x50] sm:$0xff]
    %v1726 = vld [vmem:[%s945 + $0x58] sm:$0xff]
    %v1727 = vld [vmem:[%s945 + $0x60] sm:$0xff]
    %v1728 = vld [vmem:[%s945 + $0x68] sm:$0xff]
    %v1729 = vld [vmem:[%s945 + $0x70] sm:$0xff]
    %v1730 = vld [vmem:[%s945 + $0x78] sm:$0xff]
    %v1731 = vmul.f32 %v1715, %v1633
    %v1732 = vmul.f32 %v1716, %v1637
    %v1733 = vmul.f32 %v1717, %v1633
    %v1734 = vmul.f32 %v1718, %v1637
    %v1735 = vmul.f32 %v1719, %v1633
    %v1736 = vmul.f32 %v1720, %v1637
    %v1737 = vmul.f32 %v1721, %v1633
    %v1738 = vmul.f32 %v1722, %v1637
    %v1739 = vmul.f32 %v1723, %v1633
    %v1740 = vmul.f32 %v1724, %v1637
    %v1741 = vmul.f32 %v1725, %v1633
    %v1742 = vmul.f32 %v1726, %v1637
    %v1743 = vmul.f32 %v1727, %v1633
    %v1744 = vmul.f32 %v1728, %v1637
    %v1745 = vmul.f32 %v1729, %v1633
    %v1746 = vmul.f32 %v1730, %v1637
    %v1747 = vadd.f32 %v1731, %v1658
    %v1748 = vadd.f32 %v1732, %v1662
    %v1749 = vadd.f32 %v1733, %v1658
    %v1750 = vadd.f32 %v1734, %v1662
    %v1751 = vadd.f32 %v1735, %v1658
    %v1752 = vadd.f32 %v1736, %v1662
    %v1753 = vadd.f32 %v1737, %v1658
    %v1754 = vadd.f32 %v1738, %v1662
    %v1755 = vadd.f32 %v1739, %v1658
    %v1756 = vadd.f32 %v1740, %v1662
    %v1757 = vadd.f32 %v1741, %v1658
    %v1758 = vadd.f32 %v1742, %v1662
    %v1759 = vadd.f32 %v1743, %v1658
    %v1760 = vadd.f32 %v1744, %v1662
    %v1761 = vadd.f32 %v1745, %v1658
    %v1762 = vadd.f32 %v1746, %v1662
    %v1763 = vmax.f32 %v1747, 0.0
    %v1764 = vmax.f32 %v1748, 0.0
    %v1765 = vmax.f32 %v1749, 0.0
    %v1766 = vmax.f32 %v1750, 0.0
    %v1767 = vmax.f32 %v1751, 0.0
    %v1768 = vmax.f32 %v1752, 0.0
    %v1769 = vmax.f32 %v1753, 0.0
    %v1770 = vmax.f32 %v1754, 0.0
    %v1771 = vmax.f32 %v1755, 0.0
    %v1772 = vmax.f32 %v1756, 0.0
    %v1773 = vmax.f32 %v1757, 0.0
    %v1774 = vmax.f32 %v1758, 0.0
    %v1775 = vmax.f32 %v1759, 0.0
    %v1776 = vmax.f32 %v1760, 0.0
    %v1777 = vmax.f32 %v1761, 0.0
    %v1778 = vmax.f32 %v1762, 0.0
    %s1779 = smul.addr %s943, 8
    %s1780 = scalar_lea.vmem [#allocation3], %s1779
    %1781 = vst [vmem:[%s1780] sm:$0xff] %v1763
    %1782 = vst [vmem:[%s1780 + $0x8] sm:$0xff] %v1764
    %1783 = vst [vmem:[%s1780 + $0x10] sm:$0xff] %v1765
    %1784 = vst [vmem:[%s1780 + $0x18] sm:$0xff] %v1766
    %1785 = vst [vmem:[%s1780 + $0x20] sm:$0xff] %v1767
    %1786 = vst [vmem:[%s1780 + $0x28] sm:$0xff] %v1768
    %1787 = vst [vmem:[%s1780 + $0x30] sm:$0xff] %v1769
    %1788 = vst [vmem:[%s1780 + $0x38] sm:$0xff] %v1770
    %1789 = vst [vmem:[%s1780 + $0x40] sm:$0xff] %v1771
    %1790 = vst [vmem:[%s1780 + $0x48] sm:$0xff] %v1772
    %1791 = vst [vmem:[%s1780 + $0x50] sm:$0xff] %v1773
    %1792 = vst [vmem:[%s1780 + $0x58] sm:$0xff] %v1774
    %1793 = vst [vmem:[%s1780 + $0x60] sm:$0xff] %v1775
    %1794 = vst [vmem:[%s1780 + $0x68] sm:$0xff] %v1776
    %1795 = vst [vmem:[%s1780 + $0x70] sm:$0xff] %v1777
    %1796 = vst [vmem:[%s1780 + $0x78] sm:$0xff] %v1778
    %v1797 = vld [vmem:[%s1036] sm:$0xff]
    %v1798 = vld [vmem:[%s1036 + $0x8] sm:$0xff]
    %v1799 = vld [vmem:[%s1036 + $0x10] sm:$0xff]
    %v1800 = vld [vmem:[%s1036 + $0x18] sm:$0xff]
    %v1801 = vld [vmem:[%s1036 + $0x20] sm:$0xff]
    %v1802 = vld [vmem:[%s1036 + $0x28] sm:$0xff]
    %v1803 = vld [vmem:[%s1036 + $0x30] sm:$0xff]
    %v1804 = vld [vmem:[%s1036 + $0x38] sm:$0xff]
    %v1805 = vld [vmem:[%s1036 + $0x40] sm:$0xff]
    %v1806 = vld [vmem:[%s1036 + $0x48] sm:$0xff]
    %v1807 = vld [vmem:[%s1036 + $0x50] sm:$0xff]
    %v1808 = vld [vmem:[%s1036 + $0x58] sm:$0xff]
    %v1809 = vld [vmem:[%s1036 + $0x60] sm:$0xff]
    %v1810 = vld [vmem:[%s1036 + $0x68] sm:$0xff]
    %v1811 = vld [vmem:[%s1036 + $0x70] sm:$0xff]
    %v1812 = vld [vmem:[%s1036 + $0x78] sm:$0xff]
    %v1813 = vmul.f32 %v1797, %v1633
    %v1814 = vmul.f32 %v1798, %v1637
    %v1815 = vmul.f32 %v1799, %v1633
    %v1816 = vmul.f32 %v1800, %v1637
    %v1817 = vmul.f32 %v1801, %v1633
    %v1818 = vmul.f32 %v1802, %v1637
    %v1819 = vmul.f32 %v1803, %v1633
    %v1820 = vmul.f32 %v1804, %v1637
    %v1821 = vmul.f32 %v1805, %v1633
    %v1822 = vmul.f32 %v1806, %v1637
    %v1823 = vmul.f32 %v1807, %v1633
    %v1824 = vmul.f32 %v1808, %v1637
    %v1825 = vmul.f32 %v1809, %v1633
    %v1826 = vmul.f32 %v1810, %v1637
    %v1827 = vmul.f32 %v1811, %v1633
    %v1828 = vmul.f32 %v1812, %v1637
    %v1829 = vadd.f32 %v1813, %v1658
    %v1830 = vadd.f32 %v1814, %v1662
    %v1831 = vadd.f32 %v1815, %v1658
    %v1832 = vadd.f32 %v1816, %v1662
    %v1833 = vadd.f32 %v1817, %v1658
    %v1834 = vadd.f32 %v1818, %v1662
    %v1835 = vadd.f32 %v1819, %v1658
    %v1836 = vadd.f32 %v1820, %v1662
    %v1837 = vadd.f32 %v1821, %v1658
    %v1838 = vadd.f32 %v1822, %v1662
    %v1839 = vadd.f32 %v1823, %v1658
    %v1840 = vadd.f32 %v1824, %v1662
    %v1841 = vadd.f32 %v1825, %v1658
    %v1842 = vadd.f32 %v1826, %v1662
    %v1843 = vadd.f32 %v1827, %v1658
    %v1844 = vadd.f32 %v1828, %v1662
    %v1845 = vmax.f32 %v1829, 0.0
    %v1846 = vmax.f32 %v1830, 0.0
    %v1847 = vmax.f32 %v1831, 0.0
    %v1848 = vmax.f32 %v1832, 0.0
    %v1849 = vmax.f32 %v1833, 0.0
    %v1850 = vmax.f32 %v1834, 0.0
    %v1851 = vmax.f32 %v1835, 0.0
    %v1852 = vmax.f32 %v1836, 0.0
    %v1853 = vmax.f32 %v1837, 0.0
    %v1854 = vmax.f32 %v1838, 0.0
    %v1855 = vmax.f32 %v1839, 0.0
    %v1856 = vmax.f32 %v1840, 0.0
    %v1857 = vmax.f32 %v1841, 0.0
    %v1858 = vmax.f32 %v1842, 0.0
    %v1859 = vmax.f32 %v1843, 0.0
    %v1860 = vmax.f32 %v1844, 0.0
    %s1861 = smul.addr %s1034, 8
    %s1862 = scalar_lea.vmem [#allocation3], %s1861
    %1863 = vst [vmem:[%s1862] sm:$0xff] %v1845
    %1864 = vst [vmem:[%s1862 + $0x8] sm:$0xff] %v1846
    %1865 = vst [vmem:[%s1862 + $0x10] sm:$0xff] %v1847
    %1866 = vst [vmem:[%s1862 + $0x18] sm:$0xff] %v1848
    %1867 = vst [vmem:[%s1862 + $0x20] sm:$0xff] %v1849
    %1868 = vst [vmem:[%s1862 + $0x28] sm:$0xff] %v1850
    %1869 = vst [vmem:[%s1862 + $0x30] sm:$0xff] %v1851
    %1870 = vst [vmem:[%s1862 + $0x38] sm:$0xff] %v1852
    %1871 = vst [vmem:[%s1862 + $0x40] sm:$0xff] %v1853
    %1872 = vst [vmem:[%s1862 + $0x48] sm:$0xff] %v1854
    %1873 = vst [vmem:[%s1862 + $0x50] sm:$0xff] %v1855
    %1874 = vst [vmem:[%s1862 + $0x58] sm:$0xff] %v1856
    %1875 = vst [vmem:[%s1862 + $0x60] sm:$0xff] %v1857
    %1876 = vst [vmem:[%s1862 + $0x68] sm:$0xff] %v1858
    %1877 = vst [vmem:[%s1862 + $0x70] sm:$0xff] %v1859
    %1878 = vst [vmem:[%s1862 + $0x78] sm:$0xff] %v1860
    %v1879 = vld [vmem:[%s1127] sm:$0xff]
    %v1880 = vld [vmem:[%s1127 + $0x8] sm:$0xff]
    %v1881 = vld [vmem:[%s1127 + $0x10] sm:$0xff]
    %v1882 = vld [vmem:[%s1127 + $0x18] sm:$0xff]
    %v1883 = vld [vmem:[%s1127 + $0x20] sm:$0xff]
    %v1884 = vld [vmem:[%s1127 + $0x28] sm:$0xff]
    %v1885 = vld [vmem:[%s1127 + $0x30] sm:$0xff]
    %v1886 = vld [vmem:[%s1127 + $0x38] sm:$0xff]
    %v1887 = vld [vmem:[%s1127 + $0x40] sm:$0xff]
    %v1888 = vld [vmem:[%s1127 + $0x48] sm:$0xff]
    %v1889 = vld [vmem:[%s1127 + $0x50] sm:$0xff]
    %v1890 = vld [vmem:[%s1127 + $0x58] sm:$0xff]
    %v1891 = vld [vmem:[%s1127 + $0x60] sm:$0xff]
    %v1892 = vld [vmem:[%s1127 + $0x68] sm:$0xff]
    %v1893 = vld [vmem:[%s1127 + $0x70] sm:$0xff]
    %v1894 = vld [vmem:[%s1127 + $0x78] sm:$0xff]
    %v1895 = vmul.f32 %v1879, %v1633
    %v1896 = vmul.f32 %v1880, %v1637
    %v1897 = vmul.f32 %v1881, %v1633
    %v1898 = vmul.f32 %v1882, %v1637
    %v1899 = vmul.f32 %v1883, %v1633
    %v1900 = vmul.f32 %v1884, %v1637
    %v1901 = vmul.f32 %v1885, %v1633
    %v1902 = vmul.f32 %v1886, %v1637
    %v1903 = vmul.f32 %v1887, %v1633
    %v1904 = vmul.f32 %v1888, %v1637
    %v1905 = vmul.f32 %v1889, %v1633
    %v1906 = vmul.f32 %v1890, %v1637
    %v1907 = vmul.f32 %v1891, %v1633
    %v1908 = vmul.f32 %v1892, %v1637
    %v1909 = vmul.f32 %v1893, %v1633
    %v1910 = vmul.f32 %v1894, %v1637
    %v1911 = vadd.f32 %v1895, %v1658
    %v1912 = vadd.f32 %v1896, %v1662
    %v1913 = vadd.f32 %v1897, %v1658
    %v1914 = vadd.f32 %v1898, %v1662
    %v1915 = vadd.f32 %v1899, %v1658
    %v1916 = vadd.f32 %v1900, %v1662
    %v1917 = vadd.f32 %v1901, %v1658
    %v1918 = vadd.f32 %v1902, %v1662
    %v1919 = vadd.f32 %v1903, %v1658
    %v1920 = vadd.f32 %v1904, %v1662
    %v1921 = vadd.f32 %v1905, %v1658
    %v1922 = vadd.f32 %v1906, %v1662
    %v1923 = vadd.f32 %v1907, %v1658
    %v1924 = vadd.f32 %v1908, %v1662
    %v1925 = vadd.f32 %v1909, %v1658
    %v1926 = vadd.f32 %v1910, %v1662
    %v1927 = vmax.f32 %v1911, 0.0
    %v1928 = vmax.f32 %v1912, 0.0
    %v1929 = vmax.f32 %v1913, 0.0
    %v1930 = vmax.f32 %v1914, 0.0
    %v1931 = vmax.f32 %v1915, 0.0
    %v1932 = vmax.f32 %v1916, 0.0
    %v1933 = vmax.f32 %v1917, 0.0
    %v1934 = vmax.f32 %v1918, 0.0
    %v1935 = vmax.f32 %v1919, 0.0
    %v1936 = vmax.f32 %v1920, 0.0
    %v1937 = vmax.f32 %v1921, 0.0
    %v1938 = vmax.f32 %v1922, 0.0
    %v1939 = vmax.f32 %v1923, 0.0
    %v1940 = vmax.f32 %v1924, 0.0
    %v1941 = vmax.f32 %v1925, 0.0
    %v1942 = vmax.f32 %v1926, 0.0
    %s1943 = smul.addr %s1125, 8
    %s1944 = scalar_lea.vmem [#allocation3], %s1943
    %1945 = vst [vmem:[%s1944] sm:$0xff] %v1927
    %1946 = vst [vmem:[%s1944 + $0x8] sm:$0xff] %v1928
    %1947 = vst [vmem:[%s1944 + $0x10] sm:$0xff] %v1929
    %1948 = vst [vmem:[%s1944 + $0x18] sm:$0xff] %v1930
    %1949 = vst [vmem:[%s1944 + $0x20] sm:$0xff] %v1931
    %1950 = vst [vmem:[%s1944 + $0x28] sm:$0xff] %v1932
    %1951 = vst [vmem:[%s1944 + $0x30] sm:$0xff] %v1933
    %1952 = vst [vmem:[%s1944 + $0x38] sm:$0xff] %v1934
    %1953 = vst [vmem:[%s1944 + $0x40] sm:$0xff] %v1935
    %1954 = vst [vmem:[%s1944 + $0x48] sm:$0xff] %v1936
    %1955 = vst [vmem:[%s1944 + $0x50] sm:$0xff] %v1937
    %1956 = vst [vmem:[%s1944 + $0x58] sm:$0xff] %v1938
    %1957 = vst [vmem:[%s1944 + $0x60] sm:$0xff] %v1939
    %1958 = vst [vmem:[%s1944 + $0x68] sm:$0xff] %v1940
    %1959 = vst [vmem:[%s1944 + $0x70] sm:$0xff] %v1941
    %1960 = vst [vmem:[%s1944 + $0x78] sm:$0xff] %v1942
    %v1961 = vld [vmem:[%s1218] sm:$0xff]
    %v1962 = vld [vmem:[%s1218 + $0x8] sm:$0xff]
    %v1963 = vld [vmem:[%s1218 + $0x10] sm:$0xff]
    %v1964 = vld [vmem:[%s1218 + $0x18] sm:$0xff]
    %v1965 = vld [vmem:[%s1218 + $0x20] sm:$0xff]
    %v1966 = vld [vmem:[%s1218 + $0x28] sm:$0xff]
    %v1967 = vld [vmem:[%s1218 + $0x30] sm:$0xff]
    %v1968 = vld [vmem:[%s1218 + $0x38] sm:$0xff]
    %v1969 = vld [vmem:[%s1218 + $0x40] sm:$0xff]
    %v1970 = vld [vmem:[%s1218 + $0x48] sm:$0xff]
    %v1971 = vld [vmem:[%s1218 + $0x50] sm:$0xff]
    %v1972 = vld [vmem:[%s1218 + $0x58] sm:$0xff]
    %v1973 = vld [vmem:[%s1218 + $0x60] sm:$0xff]
    %v1974 = vld [vmem:[%s1218 + $0x68] sm:$0xff]
    %v1975 = vld [vmem:[%s1218 + $0x70] sm:$0xff]
    %v1976 = vld [vmem:[%s1218 + $0x78] sm:$0xff]
    %v1977 = vmul.f32 %v1961, %v1633
    %v1978 = vmul.f32 %v1962, %v1637
    %v1979 = vmul.f32 %v1963, %v1633
    %v1980 = vmul.f32 %v1964, %v1637
    %v1981 = vmul.f32 %v1965, %v1633
    %v1982 = vmul.f32 %v1966, %v1637
    %v1983 = vmul.f32 %v1967, %v1633
    %v1984 = vmul.f32 %v1968, %v1637
    %v1985 = vmul.f32 %v1969, %v1633
    %v1986 = vmul.f32 %v1970, %v1637
    %v1987 = vmul.f32 %v1971, %v1633
    %v1988 = vmul.f32 %v1972, %v1637
    %v1989 = vmul.f32 %v1973, %v1633
    %v1990 = vmul.f32 %v1974, %v1637
    %v1991 = vmul.f32 %v1975, %v1633
    %v1992 = vmul.f32 %v1976, %v1637
    %v1993 = vadd.f32 %v1977, %v1658
    %v1994 = vadd.f32 %v1978, %v1662
    %v1995 = vadd.f32 %v1979, %v1658
    %v1996 = vadd.f32 %v1980, %v1662
    %v1997 = vadd.f32 %v1981, %v1658
    %v1998 = vadd.f32 %v1982, %v1662
    %v1999 = vadd.f32 %v1983, %v1658
    %v2000 = vadd.f32 %v1984, %v1662
    %v2001 = vadd.f32 %v1985, %v1658
    %v2002 = vadd.f32 %v1986, %v1662
    %v2003 = vadd.f32 %v1987, %v1658
    %v2004 = vadd.f32 %v1988, %v1662
    %v2005 = vadd.f32 %v1989, %v1658
    %v2006 = vadd.f32 %v1990, %v1662
    %v2007 = vadd.f32 %v1991, %v1658
    %v2008 = vadd.f32 %v1992, %v1662
    %v2009 = vmax.f32 %v1993, 0.0
    %v2010 = vmax.f32 %v1994, 0.0
    %v2011 = vmax.f32 %v1995, 0.0
    %v2012 = vmax.f32 %v1996, 0.0
    %v2013 = vmax.f32 %v1997, 0.0
    %v2014 = vmax.f32 %v1998, 0.0
    %v2015 = vmax.f32 %v1999, 0.0
    %v2016 = vmax.f32 %v2000, 0.0
    %v2017 = vmax.f32 %v2001, 0.0
    %v2018 = vmax.f32 %v2002, 0.0
    %v2019 = vmax.f32 %v2003, 0.0
    %v2020 = vmax.f32 %v2004, 0.0
    %v2021 = vmax.f32 %v2005, 0.0
    %v2022 = vmax.f32 %v2006, 0.0
    %v2023 = vmax.f32 %v2007, 0.0
    %v2024 = vmax.f32 %v2008, 0.0
    %s2025 = smul.addr %s1216, 8
    %s2026 = scalar_lea.vmem [#allocation3], %s2025
    %2027 = vst [vmem:[%s2026] sm:$0xff] %v2009
    %2028 = vst [vmem:[%s2026 + $0x8] sm:$0xff] %v2010
    %2029 = vst [vmem:[%s2026 + $0x10] sm:$0xff] %v2011
    %2030 = vst [vmem:[%s2026 + $0x18] sm:$0xff] %v2012
    %2031 = vst [vmem:[%s2026 + $0x20] sm:$0xff] %v2013
    %2032 = vst [vmem:[%s2026 + $0x28] sm:$0xff] %v2014
    %2033 = vst [vmem:[%s2026 + $0x30] sm:$0xff] %v2015
    %2034 = vst [vmem:[%s2026 + $0x38] sm:$0xff] %v2016
    %2035 = vst [vmem:[%s2026 + $0x40] sm:$0xff] %v2017
    %2036 = vst [vmem:[%s2026 + $0x48] sm:$0xff] %v2018
    %2037 = vst [vmem:[%s2026 + $0x50] sm:$0xff] %v2019
    %2038 = vst [vmem:[%s2026 + $0x58] sm:$0xff] %v2020
    %2039 = vst [vmem:[%s2026 + $0x60] sm:$0xff] %v2021
    %2040 = vst [vmem:[%s2026 + $0x68] sm:$0xff] %v2022
    %2041 = vst [vmem:[%s2026 + $0x70] sm:$0xff] %v2023
    %2042 = vst [vmem:[%s2026 + $0x78] sm:$0xff] %v2024
    %v2043 = vld [vmem:[%s1309] sm:$0xff]
    %v2044 = vld [vmem:[%s1309 + $0x8] sm:$0xff]
    %v2045 = vld [vmem:[%s1309 + $0x10] sm:$0xff]
    %v2046 = vld [vmem:[%s1309 + $0x18] sm:$0xff]
    %v2047 = vld [vmem:[%s1309 + $0x20] sm:$0xff]
    %v2048 = vld [vmem:[%s1309 + $0x28] sm:$0xff]
    %v2049 = vld [vmem:[%s1309 + $0x30] sm:$0xff]
    %v2050 = vld [vmem:[%s1309 + $0x38] sm:$0xff]
    %v2051 = vld [vmem:[%s1309 + $0x40] sm:$0xff]
    %v2052 = vld [vmem:[%s1309 + $0x48] sm:$0xff]
    %v2053 = vld [vmem:[%s1309 + $0x50] sm:$0xff]
    %v2054 = vld [vmem:[%s1309 + $0x58] sm:$0xff]
    %v2055 = vld [vmem:[%s1309 + $0x60] sm:$0xff]
    %v2056 = vld [vmem:[%s1309 + $0x68] sm:$0xff]
    %v2057 = vld [vmem:[%s1309 + $0x70] sm:$0xff]
    %v2058 = vld [vmem:[%s1309 + $0x78] sm:$0xff]
    %v2059 = vmul.f32 %v2043, %v1633
    %v2060 = vmul.f32 %v2044, %v1637
    %v2061 = vmul.f32 %v2045, %v1633
    %v2062 = vmul.f32 %v2046, %v1637
    %v2063 = vmul.f32 %v2047, %v1633
    %v2064 = vmul.f32 %v2048, %v1637
    %v2065 = vmul.f32 %v2049, %v1633
    %v2066 = vmul.f32 %v2050, %v1637
    %v2067 = vmul.f32 %v2051, %v1633
    %v2068 = vmul.f32 %v2052, %v1637
    %v2069 = vmul.f32 %v2053, %v1633
    %v2070 = vmul.f32 %v2054, %v1637
    %v2071 = vmul.f32 %v2055, %v1633
    %v2072 = vmul.f32 %v2056, %v1637
    %v2073 = vmul.f32 %v2057, %v1633
    %v2074 = vmul.f32 %v2058, %v1637
    %v2075 = vadd.f32 %v2059, %v1658
    %v2076 = vadd.f32 %v2060, %v1662
    %v2077 = vadd.f32 %v2061, %v1658
    %v2078 = vadd.f32 %v2062, %v1662
    %v2079 = vadd.f32 %v2063, %v1658
    %v2080 = vadd.f32 %v2064, %v1662
    %v2081 = vadd.f32 %v2065, %v1658
    %v2082 = vadd.f32 %v2066, %v1662
    %v2083 = vadd.f32 %v2067, %v1658
    %v2084 = vadd.f32 %v2068, %v1662
    %v2085 = vadd.f32 %v2069, %v1658
    %v2086 = vadd.f32 %v2070, %v1662
    %v2087 = vadd.f32 %v2071, %v1658
    %v2088 = vadd.f32 %v2072, %v1662
    %v2089 = vadd.f32 %v2073, %v1658
    %v2090 = vadd.f32 %v2074, %v1662
    %v2091 = vmax.f32 %v2075, 0.0
    %v2092 = vmax.f32 %v2076, 0.0
    %v2093 = vmax.f32 %v2077, 0.0
    %v2094 = vmax.f32 %v2078, 0.0
    %v2095 = vmax.f32 %v2079, 0.0
    %v2096 = vmax.f32 %v2080, 0.0
    %v2097 = vmax.f32 %v2081, 0.0
    %v2098 = vmax.f32 %v2082, 0.0
    %v2099 = vmax.f32 %v2083, 0.0
    %v2100 = vmax.f32 %v2084, 0.0
    %v2101 = vmax.f32 %v2085, 0.0
    %v2102 = vmax.f32 %v2086, 0.0
    %v2103 = vmax.f32 %v2087, 0.0
    %v2104 = vmax.f32 %v2088, 0.0
    %v2105 = vmax.f32 %v2089, 0.0
    %v2106 = vmax.f32 %v2090, 0.0
    %s2107 = smul.addr %s1307, 8
    %s2108 = scalar_lea.vmem [#allocation3], %s2107
    %2109 = vst [vmem:[%s2108] sm:$0xff] %v2091
    %2110 = vst [vmem:[%s2108 + $0x8] sm:$0xff] %v2092
    %2111 = vst [vmem:[%s2108 + $0x10] sm:$0xff] %v2093
    %2112 = vst [vmem:[%s2108 + $0x18] sm:$0xff] %v2094
    %2113 = vst [vmem:[%s2108 + $0x20] sm:$0xff] %v2095
    %2114 = vst [vmem:[%s2108 + $0x28] sm:$0xff] %v2096
    %2115 = vst [vmem:[%s2108 + $0x30] sm:$0xff] %v2097
    %2116 = vst [vmem:[%s2108 + $0x38] sm:$0xff] %v2098
    %2117 = vst [vmem:[%s2108 + $0x40] sm:$0xff] %v2099
    %2118 = vst [vmem:[%s2108 + $0x48] sm:$0xff] %v2100
    %2119 = vst [vmem:[%s2108 + $0x50] sm:$0xff] %v2101
    %2120 = vst [vmem:[%s2108 + $0x58] sm:$0xff] %v2102
    %2121 = vst [vmem:[%s2108 + $0x60] sm:$0xff] %v2103
    %2122 = vst [vmem:[%s2108 + $0x68] sm:$0xff] %v2104
    %2123 = vst [vmem:[%s2108 + $0x70] sm:$0xff] %v2105
    %2124 = vst [vmem:[%s2108 + $0x78] sm:$0xff] %v2106
    %v2125 = vld [vmem:[%s1400] sm:$0xff]
    %v2126 = vld [vmem:[%s1400 + $0x8] sm:$0xff]
    %v2127 = vld [vmem:[%s1400 + $0x10] sm:$0xff]
    %v2128 = vld [vmem:[%s1400 + $0x18] sm:$0xff]
    %v2129 = vld [vmem:[%s1400 + $0x20] sm:$0xff]
    %v2130 = vld [vmem:[%s1400 + $0x28] sm:$0xff]
    %v2131 = vld [vmem:[%s1400 + $0x30] sm:$0xff]
    %v2132 = vld [vmem:[%s1400 + $0x38] sm:$0xff]
    %v2133 = vld [vmem:[%s1400 + $0x40] sm:$0xff]
    %v2134 = vld [vmem:[%s1400 + $0x48] sm:$0xff]
    %v2135 = vld [vmem:[%s1400 + $0x50] sm:$0xff]
    %v2136 = vld [vmem:[%s1400 + $0x58] sm:$0xff]
    %v2137 = vld [vmem:[%s1400 + $0x60] sm:$0xff]
    %v2138 = vld [vmem:[%s1400 + $0x68] sm:$0xff]
    %v2139 = vld [vmem:[%s1400 + $0x70] sm:$0xff]
    %v2140 = vld [vmem:[%s1400 + $0x78] sm:$0xff]
    %v2141 = vmul.f32 %v2125, %v1633
    %v2142 = vmul.f32 %v2126, %v1637
    %v2143 = vmul.f32 %v2127, %v1633
    %v2144 = vmul.f32 %v2128, %v1637
    %v2145 = vmul.f32 %v2129, %v1633
    %v2146 = vmul.f32 %v2130, %v1637
    %v2147 = vmul.f32 %v2131, %v1633
    %v2148 = vmul.f32 %v2132, %v1637
    %v2149 = vmul.f32 %v2133, %v1633
    %v2150 = vmul.f32 %v2134, %v1637
    %v2151 = vmul.f32 %v2135, %v1633
    %v2152 = vmul.f32 %v2136, %v1637
    %v2153 = vmul.f32 %v2137, %v1633
    %v2154 = vmul.f32 %v2138, %v1637
    %v2155 = vmul.f32 %v2139, %v1633
    %v2156 = vmul.f32 %v2140, %v1637
    %v2157 = vadd.f32 %v2141, %v1658
    %v2158 = vadd.f32 %v2142, %v1662
    %v2159 = vadd.f32 %v2143, %v1658
    %v2160 = vadd.f32 %v2144, %v1662
    %v2161 = vadd.f32 %v2145, %v1658
    %v2162 = vadd.f32 %v2146, %v1662
    %v2163 = vadd.f32 %v2147, %v1658
    %v2164 = vadd.f32 %v2148, %v1662
    %v2165 = vadd.f32 %v2149, %v1658
    %v2166 = vadd.f32 %v2150, %v1662
    %v2167 = vadd.f32 %v2151, %v1658
    %v2168 = vadd.f32 %v2152, %v1662
    %v2169 = vadd.f32 %v2153, %v1658
    %v2170 = vadd.f32 %v2154, %v1662
    %v2171 = vadd.f32 %v2155, %v1658
    %v2172 = vadd.f32 %v2156, %v1662
    %v2173 = vmax.f32 %v2157, 0.0
    %v2174 = vmax.f32 %v2158, 0.0
    %v2175 = vmax.f32 %v2159, 0.0
    %v2176 = vmax.f32 %v2160, 0.0
    %v2177 = vmax.f32 %v2161, 0.0
    %v2178 = vmax.f32 %v2162, 0.0
    %v2179 = vmax.f32 %v2163, 0.0
    %v2180 = vmax.f32 %v2164, 0.0
    %v2181 = vmax.f32 %v2165, 0.0
    %v2182 = vmax.f32 %v2166, 0.0
    %v2183 = vmax.f32 %v2167, 0.0
    %v2184 = vmax.f32 %v2168, 0.0
    %v2185 = vmax.f32 %v2169, 0.0
    %v2186 = vmax.f32 %v2170, 0.0
    %v2187 = vmax.f32 %v2171, 0.0
    %v2188 = vmax.f32 %v2172, 0.0
    %s2189 = smul.addr %s1398, 8
    %s2190 = scalar_lea.vmem [#allocation3], %s2189
    %2191 = vst [vmem:[%s2190] sm:$0xff] %v2173
    %2192 = vst [vmem:[%s2190 + $0x8] sm:$0xff] %v2174
    %2193 = vst [vmem:[%s2190 + $0x10] sm:$0xff] %v2175
    %2194 = vst [vmem:[%s2190 + $0x18] sm:$0xff] %v2176
    %2195 = vst [vmem:[%s2190 + $0x20] sm:$0xff] %v2177
    %2196 = vst [vmem:[%s2190 + $0x28] sm:$0xff] %v2178
    %2197 = vst [vmem:[%s2190 + $0x30] sm:$0xff] %v2179
    %2198 = vst [vmem:[%s2190 + $0x38] sm:$0xff] %v2180
    %2199 = vst [vmem:[%s2190 + $0x40] sm:$0xff] %v2181
    %2200 = vst [vmem:[%s2190 + $0x48] sm:$0xff] %v2182
    %2201 = vst [vmem:[%s2190 + $0x50] sm:$0xff] %v2183
    %2202 = vst [vmem:[%s2190 + $0x58] sm:$0xff] %v2184
    %2203 = vst [vmem:[%s2190 + $0x60] sm:$0xff] %v2185
    %2204 = vst [vmem:[%s2190 + $0x68] sm:$0xff] %v2186
    %2205 = vst [vmem:[%s2190 + $0x70] sm:$0xff] %v2187
    %2206 = vst [vmem:[%s2190 + $0x78] sm:$0xff] %v2188
    %v2207 = vld [vmem:[%s1491] sm:$0xff]
    %v2208 = vld [vmem:[%s1491 + $0x8] sm:$0xff]
    %v2209 = vld [vmem:[%s1491 + $0x10] sm:$0xff]
    %v2210 = vld [vmem:[%s1491 + $0x18] sm:$0xff]
    %v2211 = vld [vmem:[%s1491 + $0x20] sm:$0xff]
    %v2212 = vld [vmem:[%s1491 + $0x28] sm:$0xff]
    %v2213 = vld [vmem:[%s1491 + $0x30] sm:$0xff]
    %v2214 = vld [vmem:[%s1491 + $0x38] sm:$0xff]
    %v2215 = vld [vmem:[%s1491 + $0x40] sm:$0xff]
    %v2216 = vld [vmem:[%s1491 + $0x48] sm:$0xff]
    %v2217 = vld [vmem:[%s1491 + $0x50] sm:$0xff]
    %v2218 = vld [vmem:[%s1491 + $0x58] sm:$0xff]
    %v2219 = vld [vmem:[%s1491 + $0x60] sm:$0xff]
    %v2220 = vld [vmem:[%s1491 + $0x68] sm:$0xff]
    %v2221 = vld [vmem:[%s1491 + $0x70] sm:$0xff]
    %v2222 = vld [vmem:[%s1491 + $0x78] sm:$0xff]
    %v2223 = vmul.f32 %v2207, %v1633
    %v2224 = vmul.f32 %v2208, %v1637
    %v2225 = vmul.f32 %v2209, %v1633
    %v2226 = vmul.f32 %v2210, %v1637
    %v2227 = vmul.f32 %v2211, %v1633
    %v2228 = vmul.f32 %v2212, %v1637
    %v2229 = vmul.f32 %v2213, %v1633
    %v2230 = vmul.f32 %v2214, %v1637
    %v2231 = vmul.f32 %v2215, %v1633
    %v2232 = vmul.f32 %v2216, %v1637
    %v2233 = vmul.f32 %v2217, %v1633
    %v2234 = vmul.f32 %v2218, %v1637
    %v2235 = vmul.f32 %v2219, %v1633
    %v2236 = vmul.f32 %v2220, %v1637
    %v2237 = vmul.f32 %v2221, %v1633
    %v2238 = vmul.f32 %v2222, %v1637
    %v2239 = vadd.f32 %v2223, %v1658
    %v2240 = vadd.f32 %v2224, %v1662
    %v2241 = vadd.f32 %v2225, %v1658
    %v2242 = vadd.f32 %v2226, %v1662
    %v2243 = vadd.f32 %v2227, %v1658
    %v2244 = vadd.f32 %v2228, %v1662
    %v2245 = vadd.f32 %v2229, %v1658
    %v2246 = vadd.f32 %v2230, %v1662
    %v2247 = vadd.f32 %v2231, %v1658
    %v2248 = vadd.f32 %v2232, %v1662
    %v2249 = vadd.f32 %v2233, %v1658
    %v2250 = vadd.f32 %v2234, %v1662
    %v2251 = vadd.f32 %v2235, %v1658
    %v2252 = vadd.f32 %v2236, %v1662
    %v2253 = vadd.f32 %v2237, %v1658
    %v2254 = vadd.f32 %v2238, %v1662
    %v2255 = vmax.f32 %v2239, 0.0
    %v2256 = vmax.f32 %v2240, 0.0
    %v2257 = vmax.f32 %v2241, 0.0
    %v2258 = vmax.f32 %v2242, 0.0
    %v2259 = vmax.f32 %v2243, 0.0
    %v2260 = vmax.f32 %v2244, 0.0
    %v2261 = vmax.f32 %v2245, 0.0
    %v2262 = vmax.f32 %v2246, 0.0
    %v2263 = vmax.f32 %v2247, 0.0
    %v2264 = vmax.f32 %v2248, 0.0
    %v2265 = vmax.f32 %v2249, 0.0
    %v2266 = vmax.f32 %v2250, 0.0
    %v2267 = vmax.f32 %v2251, 0.0
    %v2268 = vmax.f32 %v2252, 0.0
    %v2269 = vmax.f32 %v2253, 0.0
    %v2270 = vmax.f32 %v2254, 0.0
    %s2271 = smul.addr %s1489, 8
    %s2272 = scalar_lea.vmem [#allocation3], %s2271
    %2273 = vst [vmem:[%s2272] sm:$0xff] %v2255
    %2274 = vst [vmem:[%s2272 + $0x8] sm:$0xff] %v2256
    %2275 = vst [vmem:[%s2272 + $0x10] sm:$0xff] %v2257
    %2276 = vst [vmem:[%s2272 + $0x18] sm:$0xff] %v2258
    %2277 = vst [vmem:[%s2272 + $0x20] sm:$0xff] %v2259
    %2278 = vst [vmem:[%s2272 + $0x28] sm:$0xff] %v2260
    %2279 = vst [vmem:[%s2272 + $0x30] sm:$0xff] %v2261
    %2280 = vst [vmem:[%s2272 + $0x38] sm:$0xff] %v2262
    %2281 = vst [vmem:[%s2272 + $0x40] sm:$0xff] %v2263
    %2282 = vst [vmem:[%s2272 + $0x48] sm:$0xff] %v2264
    %2283 = vst [vmem:[%s2272 + $0x50] sm:$0xff] %v2265
    %2284 = vst [vmem:[%s2272 + $0x58] sm:$0xff] %v2266
    %2285 = vst [vmem:[%s2272 + $0x60] sm:$0xff] %v2267
    %2286 = vst [vmem:[%s2272 + $0x68] sm:$0xff] %v2268
    %2287 = vst [vmem:[%s2272 + $0x70] sm:$0xff] %v2269
    %2288 = vst [vmem:[%s2272 + $0x78] sm:$0xff] %v2270
    // Predicated region
    $region18: #{conv_block_forward.1} parent=1 // pred_check
      _
    $region19: #{conv_block_forward.1} parent=1 // pred_check_branch
      %2290 = sbr.rel (0) target = $region21
    $region20: #{conv_block_forward.1} parent=1 // pred_region
      %s2292 = ssub.s32 16384, 16384
      %2293 = vsyncadd [#allocation4], %s2292
      %s2294 = sshll.u32 [#allocation3], 4
      %s2295 = int_to_ptr.vmem [resolvable:$true] %s2294
      %2300 = dma.vmem_to_hbm [thread:$0]  %s2295, 16384, %s4, [#allocation4], 256, 256, 16
    $region21: #{conv_block_forward.1} parent=1 // pred_fallthru
      _
    // Predicated region
    $region22: #{conv_block_forward.1} parent=1 // pred_check
      _
    $region23: #{conv_block_forward.1} parent=1 // pred_check_branch
      %2302 = sbr.rel (0) target = $region25
    $region24: #{conv_block_forward.1} parent=1 // pred_region
      %2303 = dma.done [#allocation4], 16384
    $region25: #{conv_block_forward.1} parent=1 // pred_fallthru
      _
    %2304 = vsyncpa [#allocation4], 1

</llo_original>
